<compile_context>
chip_gen: v7x
topology: tpu7x:2x2x1
jax: 0.10.0
libtpu: 0.0.40
codegen_flags: <defaults>
</compile_context>

<pallas_src>
import functools

import jax
import jax.numpy as jnp
import numpy as np
from jax import lax
from jax.experimental import pallas as pl
from jax.experimental.pallas import tpu as pltpu


def _attention_kernel(x_ref, wqkv_ref, bqkv_ref, wp_ref, bp_ref, o_ref,
                      ctx_ref, *, n_heads, head_dim):
    """One batch element per grid step: fused QKV + per-head attention + one
    full-width output projection."""
    x = x_ref[0]                                    # (N, D), native dtype (MXU operand)

    # n_heads is a static Python int -> fully unrolled at trace time: static
    # lane-slice offsets, and cross-head MXU/softmax overlap for the scheduler.
    for h in range(n_heads):
        # Fused per-head QKV projection: one (N, D) @ (D, 3*hd) MXU pass.
        # The softmax scale is already folded into the Q weights/bias.
        qkv = (jnp.dot(x, wqkv_ref[h], preferred_element_type=jnp.float32)
               + bqkv_ref[h])                       # (N, 3*hd) f32
        q = qkv[:, :head_dim].astype(x.dtype)
        k = qkv[:, head_dim:2 * head_dim].astype(x.dtype)
        v = qkv[:, 2 * head_dim:].astype(x.dtype)

        # Scores: contract head_dim of q with head_dim of k (no explicit k.T).
        s = lax.dot_general(q, k, (((1,), (1,)), ((), ())),
                            preferred_element_type=jnp.float32)   # (N, N) f32

        # Numerically-stable softmax in f32.  Exact divide: the previous
        # approx=True reciprocal introduced ~2% relative error and failed
        # the tolerance check.
        s = s - jnp.max(s, axis=-1, keepdims=True)
        p = jnp.exp(s)
        p = p / jnp.sum(p, axis=-1, keepdims=True)

        ctx = jnp.dot(p.astype(x.dtype), v,
                      preferred_element_type=jnp.float32)         # (N, hd) f32

        # Stage this head's context into its lane slice of the (N, D) scratch
        # (narrow static store; replaces the per-head (N, D) f32 accumulator RMW).
        ctx_ref[:, h * head_dim:(h + 1) * head_dim] = ctx.astype(ctx_ref.dtype)

    # Single full-depth (K = D) output projection + bias.
    out = (jnp.dot(ctx_ref[...], wp_ref[...],
                   preferred_element_type=jnp.float32) + bp_ref[...])
    o_ref[0] = out.astype(o_ref.dtype)
    # NOTE: attn_drop / proj_drop have p=0.0 in this config -> identity.
    # TODO(synk): dropout (attn_p/proj_p > 0) not implemented (needs pltpu.prng_*).


def attention_pallas(x, wqkv, bqkv, wproj, bproj, *, n_heads):
    """x: (B, N, D).  Params in torch nn.Linear layout:
       wqkv (3D, D), bqkv (3D,), wproj (D, D), bproj (D,)."""
    B, N, D = x.shape
    hd = D // n_heads
    scale = hd ** (-0.5)

    # One-time re-arrangement into per-head FUSED qkv weight blocks.
    # torch qkv output-feature index decomposes as f = g*D + h*hd + e, g in {q,k,v}.
    w4 = wqkv.reshape(3, n_heads, hd, D)
    b4 = bqkv.reshape(3, n_heads, hd)
    # Fold the softmax scale into the Q weights/bias (scale in f32, cast back).
    w4 = w4.at[0].set((w4[0].astype(jnp.float32) * scale).astype(w4.dtype))
    b4 = b4.at[0].set((b4[0].astype(jnp.float32) * scale).astype(b4.dtype))
    # (H, D, 3*hd): for head h, x @ w_fused[h] -> [q | k | v] columns.
    w_fused = jnp.transpose(w4, (1, 3, 0, 2)).reshape(n_heads, D, 3 * hd)
    b_fused = jnp.transpose(b4, (1, 0, 2)).reshape(n_heads, 1, 3 * hd)
    # Output projection, input-major; its input row order (h, e) matches the
    # head-major column layout of the ctx scratch.
    wp = jnp.swapaxes(wproj, 0, 1)                  # (D_in, D_out)
    bp = bproj.reshape(1, D)

    kernel = functools.partial(_attention_kernel, n_heads=n_heads, head_dim=hd)
    invariant2 = lambda b_: (0, 0)     # grid-invariant blocks: fetched once, stay resident
    invariant3 = lambda b_: (0, 0, 0)

    return pl.pallas_call(
        kernel,
        out_shape=jax.ShapeDtypeStruct((B, N, D), x.dtype),
        grid=(B,),
        in_specs=[
            pl.BlockSpec((1, N, D), lambda b_: (b_, 0, 0)),       # x (per-batch tile)
            pl.BlockSpec((n_heads, D, 3 * hd), invariant3),       # fused qkv weights (q scaled)
            pl.BlockSpec((n_heads, 1, 3 * hd), invariant3),       # fused qkv bias   (q scaled)
            pl.BlockSpec((D, D), invariant2),                     # proj weight (input-major)
            pl.BlockSpec((1, D), invariant2),                     # proj bias
        ],
        out_specs=pl.BlockSpec((1, N, D), lambda b_: (b_, 0, 0)),
        scratch_shapes=[pltpu.VMEM((N, D), x.dtype)],             # per-head ctx staging
        compiler_params=pltpu.CompilerParams(
            dimension_semantics=("parallel",),
            vmem_limit_bytes=32 * 1024 * 1024),
    )(x, w_fused, b_fused, wp, bp)


def attention_ref(x, wqkv, bqkv, wproj, bproj, *, n_heads):
    """Pure-JAX reference matching the PyTorch forward exactly."""
    B, N, D = x.shape
    hd = D // n_heads
    qkv = x @ wqkv.T + bqkv                                       # (B, N, 3D)
    qkv = qkv.reshape(B, N, 3, n_heads, hd).transpose(2, 0, 3, 1, 4)
    q, k, v = qkv[0], qkv[1], qkv[2]                              # (B, H, N, hd)
    attn = jnp.einsum("bhqd,bhkd->bhqk", q, k) * hd ** (-0.5)
    attn = jax.nn.softmax(attn, axis=-1)
    out = jnp.einsum("bhqk,bhkd->bhqd", attn, v)                  # (B, H, N, hd)
    out = out.transpose(0, 2, 1, 3).reshape(B, N, D)
    return out @ wproj.T + bproj


if __name__ == "__main__":
    B, N, D, H = 2, 8, 32, 4  # batch, seq, dim, n_heads (head_dim = 8)

    key = jax.random.PRNGKey(0)
    kx, kw1, kb1, kw2, kb2 = jax.random.split(key, 5)

    x = jax.random.normal(kx, (B, N, D), dtype=jnp.float32)
    # Deterministic synthetic parameters (torch Linear layout: weight (out, in)).
    wqkv = 0.02 * jax.random.normal(kw1, (3 * D, D), dtype=jnp.float32)
    bqkv = 0.02 * jax.random.normal(kb1, (3 * D,), dtype=jnp.float32)
    wproj = 0.02 * jax.random.normal(kw2, (D, D), dtype=jnp.float32)
    bproj = 0.02 * jax.random.normal(kb2, (D,), dtype=jnp.float32)

    out = attention_pallas(x, wqkv, bqkv, wproj, bproj, n_heads=H)
    out = jax.block_until_ready(out)

    ref = attention_ref(x, wqkv, bqkv, wproj, bproj, n_heads=H)
    np.testing.assert_allclose(np.asarray(out), np.asarray(ref), rtol=1e-3, atol=1e-5)

    # bf16 smoke test: native-dtype operands hit the MXU bf16 fast path.
    out_bf16 = attention_pallas(
        x.astype(jnp.bfloat16), wqkv.astype(jnp.bfloat16), bqkv.astype(jnp.bfloat16),
        wproj.astype(jnp.bfloat16), bproj.astype(jnp.bfloat16), n_heads=H)
    out_bf16 = jax.block_until_ready(out_bf16)
    np.testing.assert_allclose(np.asarray(out_bf16.astype(jnp.float32)),
                               np.asarray(ref), rtol=5e-2, atol=5e-2)

    print("KERNEL_OK")
</pallas_src>

<mosaic_0001>
module attributes {stable_mosaic.version = 11 : i64} {
  func.func @_attention_kernel(%arg0: i32, %arg1: memref<1x8x32xf32, #tpu.memory_space<vmem>>, %arg2: memref<4x32x24xf32, #tpu.memory_space<vmem>>, %arg3: memref<4x1x24xf32, #tpu.memory_space<vmem>>, %arg4: memref<32x32xf32, #tpu.memory_space<vmem>>, %arg5: memref<1x32xf32, #tpu.memory_space<vmem>>, %arg6: memref<1x8x32xf32, #tpu.memory_space<vmem>>, %arg7: memref<8x32xf32, #tpu.memory_space<vmem>>) attributes {dimension_semantics = [#tpu.dimension_semantics<parallel>], iteration_bounds = array<i64: 2>, scalar_prefetch = 0 : i64, scratch_operands = 1 : i64, tpu.core_type = #tpu.core_type<tc>, window_params = [{transform_indices = @transform_0, window_bounds = array<i64: 1, 8, 32>}, {pipeline_mode = #tpu.pipeline_mode<synchronous>, transform_indices = @transform_1, window_bounds = array<i64: 4, 32, 24>}, {pipeline_mode = #tpu.pipeline_mode<synchronous>, transform_indices = @transform_2, window_bounds = array<i64: 4, 1, 24>}, {pipeline_mode = #tpu.pipeline_mode<synchronous>, transform_indices = @transform_3, window_bounds = array<i64: 32, 32>}, {pipeline_mode = #tpu.pipeline_mode<synchronous>, transform_indices = @transform_4, window_bounds = array<i64: 1, 32>}, {transform_indices = @transform_5, window_bounds = array<i64: 1, 8, 32>}]} {
    %c0 = arith.constant 0 : index
    %c0_0 = arith.constant 0 : index
    %c0_1 = arith.constant 0 : index
    %0 = vector.load %arg1[%c0, %c0_0, %c0_1] : memref<1x8x32xf32, #tpu.memory_space<vmem>>, vector<1x8x32xf32>
    %1 = vector.shape_cast %0 : vector<1x8x32xf32> to vector<8x32xf32>
    %c0_2 = arith.constant 0 : index
    %c0_3 = arith.constant 0 : index
    %c0_4 = arith.constant 0 : index
    %2 = vector.load %arg2[%c0_2, %c0_3, %c0_4] : memref<4x32x24xf32, #tpu.memory_space<vmem>>, vector<1x32x24xf32>
    %3 = vector.shape_cast %2 : vector<1x32x24xf32> to vector<32x24xf32>
    %cst = arith.constant dense<0.000000e+00> : vector<8x24xf32>
    %4 = tpu.matmul %1, %3, %cst {dimension_numbers = #tpu.dot_dimension_numbers<[1], [0], [0], [1], [0, 0, 1, 1], [], []>} : vector<8x32xf32>, vector<32x24xf32>, vector<8x24xf32> -> vector<8x24xf32>
    %c0_5 = arith.constant 0 : index
    %c0_6 = arith.constant 0 : index
    %c0_7 = arith.constant 0 : index
    %5 = vector.load %arg3[%c0_5, %c0_6, %c0_7] : memref<4x1x24xf32, #tpu.memory_space<vmem>>, vector<1x1x24xf32>
    %6 = vector.shape_cast %5 : vector<1x1x24xf32> to vector<1x24xf32>
    %7 = vector.broadcast %6 : vector<1x24xf32> to vector<8x24xf32>
    %8 = arith.addf %4, %7 : vector<8x24xf32>
    %9 = vector.extract_strided_slice %8 {offsets = [0, 0], sizes = [8, 8], strides = [1, 1]} : vector<8x24xf32> to vector<8x8xf32>
    %10 = vector.extract_strided_slice %8 {offsets = [0, 8], sizes = [8, 8], strides = [1, 1]} : vector<8x24xf32> to vector<8x8xf32>
    %11 = vector.extract_strided_slice %8 {offsets = [0, 16], sizes = [8, 8], strides = [1, 1]} : vector<8x24xf32> to vector<8x8xf32>
    %cst_8 = arith.constant dense<0.000000e+00> : vector<8x8xf32>
    %12 = tpu.matmul %9, %10, %cst_8 {dimension_numbers = #tpu.dot_dimension_numbers<[1], [1], [0], [0], [0, 0, 1, 0], [], []>} : vector<8x8xf32>, vector<8x8xf32>, vector<8x8xf32> -> vector<8x8xf32>
    %cst_9 = arith.constant dense<0xFF800000> : vector<8xf32>
    %13 = vector.multi_reduction <maximumf>, %12, %cst_9 [1] : vector<8x8xf32> to vector<8xf32>
    %14 = vector.shape_cast %13 : vector<8xf32> to vector<8x1xf32>
    %15 = vector.broadcast %14 : vector<8x1xf32> to vector<8x8xf32>
    %16 = arith.subf %12, %15 : vector<8x8xf32>
    %17 = math.exp %16 : vector<8x8xf32>
    %cst_10 = arith.constant dense<0.000000e+00> : vector<8xf32>
    %18 = vector.multi_reduction <add>, %17, %cst_10 [1] : vector<8x8xf32> to vector<8xf32>
    %19 = vector.shape_cast %18 : vector<8xf32> to vector<8x1xf32>
    %20 = vector.broadcast %19 : vector<8x1xf32> to vector<8x8xf32>
    %21 = arith.divf %17, %20 : vector<8x8xf32>
    %cst_11 = arith.constant dense<0.000000e+00> : vector<8x8xf32>
    %22 = tpu.matmul %21, %11, %cst_11 {dimension_numbers = #tpu.dot_dimension_numbers<[1], [0], [0], [1], [0, 0, 1, 1], [], []>} : vector<8x8xf32>, vector<8x8xf32>, vector<8x8xf32> -> vector<8x8xf32>
    %c0_12 = arith.constant 0 : index
    %c0_13 = arith.constant 0 : index
    %23 = vector.load %arg7[%c0_12, %c0_13] : memref<8x32xf32, #tpu.memory_space<vmem>>, vector<8x8xf32>
    tpu.vector_store %arg7[%c0_12, %c0_13], %22 {strides = array<i32>} : memref<8x32xf32, #tpu.memory_space<vmem>>, vector<8x8xf32>,
    %c1 = arith.constant 1 : index
    %c0_14 = arith.constant 0 : index
    %c0_15 = arith.constant 0 : index
    %24 = vector.load %arg2[%c1, %c0_14, %c0_15] : memref<4x32x24xf32, #tpu.memory_space<vmem>>, vector<1x32x24xf32>
    %25 = vector.shape_cast %24 : vector<1x32x24xf32> to vector<32x24xf32>
    %cst_16 = arith.constant dense<0.000000e+00> : vector<8x24xf32>
    %26 = tpu.matmul %1, %25, %cst_16 {dimension_numbers = #tpu.dot_dimension_numbers<[1], [0], [0], [1], [0, 0, 1, 1], [], []>} : vector<8x32xf32>, vector<32x24xf32>, vector<8x24xf32> -> vector<8x24xf32>
    %c1_17 = arith.constant 1 : index
    %c0_18 = arith.constant 0 : index
    %c0_19 = arith.constant 0 : index
    %27 = vector.load %arg3[%c1_17, %c0_18, %c0_19] : memref<4x1x24xf32, #tpu.memory_space<vmem>>, vector<1x1x24xf32>
    %28 = vector.shape_cast %27 : vector<1x1x24xf32> to vector<1x24xf32>
    %29 = vector.broadcast %28 : vector<1x24xf32> to vector<8x24xf32>
    %30 = arith.addf %26, %29 : vector<8x24xf32>
    %31 = vector.extract_strided_slice %30 {offsets = [0, 0], sizes = [8, 8], strides = [1, 1]} : vector<8x24xf32> to vector<8x8xf32>
    %32 = vector.extract_strided_slice %30 {offsets = [0, 8], sizes = [8, 8], strides = [1, 1]} : vector<8x24xf32> to vector<8x8xf32>
    %33 = vector.extract_strided_slice %30 {offsets = [0, 16], sizes = [8, 8], strides = [1, 1]} : vector<8x24xf32> to vector<8x8xf32>
    %cst_20 = arith.constant dense<0.000000e+00> : vector<8x8xf32>
    %34 = tpu.matmul %31, %32, %cst_20 {dimension_numbers = #tpu.dot_dimension_numbers<[1], [1], [0], [0], [0, 0, 1, 0], [], []>} : vector<8x8xf32>, vector<8x8xf32>, vector<8x8xf32> -> vector<8x8xf32>
    %cst_21 = arith.constant dense<0xFF800000> : vector<8xf32>
    %35 = vector.multi_reduction <maximumf>, %34, %cst_21 [1] : vector<8x8xf32> to vector<8xf32>
    %36 = vector.shape_cast %35 : vector<8xf32> to vector<8x1xf32>
    %37 = vector.broadcast %36 : vector<8x1xf32> to vector<8x8xf32>
    %38 = arith.subf %34, %37 : vector<8x8xf32>
    %39 = math.exp %38 : vector<8x8xf32>
    %cst_22 = arith.constant dense<0.000000e+00> : vector<8xf32>
    %40 = vector.multi_reduction <add>, %39, %cst_22 [1] : vector<8x8xf32> to vector<8xf32>
    %41 = vector.shape_cast %40 : vector<8xf32> to vector<8x1xf32>
    %42 = vector.broadcast %41 : vector<8x1xf32> to vector<8x8xf32>
    %43 = arith.divf %39, %42 : vector<8x8xf32>
    %cst_23 = arith.constant dense<0.000000e+00> : vector<8x8xf32>
    %44 = tpu.matmul %43, %33, %cst_23 {dimension_numbers = #tpu.dot_dimension_numbers<[1], [0], [0], [1], [0, 0, 1, 1], [], []>} : vector<8x8xf32>, vector<8x8xf32>, vector<8x8xf32> -> vector<8x8xf32>
    %c0_24 = arith.constant 0 : index
    %c8 = arith.constant 8 : index
    %45 = vector.load %arg7[%c0_24, %c8] : memref<8x32xf32, #tpu.memory_space<vmem>>, vector<8x8xf32>
    tpu.vector_store %arg7[%c0_24, %c8], %44 {strides = array<i32>} : memref<8x32xf32, #tpu.memory_space<vmem>>, vector<8x8xf32>,
    %c2 = arith.constant 2 : index
    %c0_25 = arith.constant 0 : index
    %c0_26 = arith.constant 0 : index
    %46 = vector.load %arg2[%c2, %c0_25, %c0_26] : memref<4x32x24xf32, #tpu.memory_space<vmem>>, vector<1x32x24xf32>
    %47 = vector.shape_cast %46 : vector<1x32x24xf32> to vector<32x24xf32>
    %cst_27 = arith.constant dense<0.000000e+00> : vector<8x24xf32>
    %48 = tpu.matmul %1, %47, %cst_27 {dimension_numbers = #tpu.dot_dimension_numbers<[1], [0], [0], [1], [0, 0, 1, 1], [], []>} : vector<8x32xf32>, vector<32x24xf32>, vector<8x24xf32> -> vector<8x24xf32>
    %c2_28 = arith.constant 2 : index
    %c0_29 = arith.constant 0 : index
    %c0_30 = arith.constant 0 : index
    %49 = vector.load %arg3[%c2_28, %c0_29, %c0_30] : memref<4x1x24xf32, #tpu.memory_space<vmem>>, vector<1x1x24xf32>
    %50 = vector.shape_cast %49 : vector<1x1x24xf32> to vector<1x24xf32>
    %51 = vector.broadcast %50 : vector<1x24xf32> to vector<8x24xf32>
    %52 = arith.addf %48, %51 : vector<8x24xf32>
    %53 = vector.extract_strided_slice %52 {offsets = [0, 0], sizes = [8, 8], strides = [1, 1]} : vector<8x24xf32> to vector<8x8xf32>
    %54 = vector.extract_strided_slice %52 {offsets = [0, 8], sizes = [8, 8], strides = [1, 1]} : vector<8x24xf32> to vector<8x8xf32>
    %55 = vector.extract_strided_slice %52 {offsets = [0, 16], sizes = [8, 8], strides = [1, 1]} : vector<8x24xf32> to vector<8x8xf32>
    %cst_31 = arith.constant dense<0.000000e+00> : vector<8x8xf32>
    %56 = tpu.matmul %53, %54, %cst_31 {dimension_numbers = #tpu.dot_dimension_numbers<[1], [1], [0], [0], [0, 0, 1, 0], [], []>} : vector<8x8xf32>, vector<8x8xf32>, vector<8x8xf32> -> vector<8x8xf32>
    %cst_32 = arith.constant dense<0xFF800000> : vector<8xf32>
    %57 = vector.multi_reduction <maximumf>, %56, %cst_32 [1] : vector<8x8xf32> to vector<8xf32>
    %58 = vector.shape_cast %57 : vector<8xf32> to vector<8x1xf32>
    %59 = vector.broadcast %58 : vector<8x1xf32> to vector<8x8xf32>
    %60 = arith.subf %56, %59 : vector<8x8xf32>
    %61 = math.exp %60 : vector<8x8xf32>
    %cst_33 = arith.constant dense<0.000000e+00> : vector<8xf32>
    %62 = vector.multi_reduction <add>, %61, %cst_33 [1] : vector<8x8xf32> to vector<8xf32>
    %63 = vector.shape_cast %62 : vector<8xf32> to vector<8x1xf32>
    %64 = vector.broadcast %63 : vector<8x1xf32> to vector<8x8xf32>
    %65 = arith.divf %61, %64 : vector<8x8xf32>
    %cst_34 = arith.constant dense<0.000000e+00> : vector<8x8xf32>
    %66 = tpu.matmul %65, %55, %cst_34 {dimension_numbers = #tpu.dot_dimension_numbers<[1], [0], [0], [1], [0, 0, 1, 1], [], []>} : vector<8x8xf32>, vector<8x8xf32>, vector<8x8xf32> -> vector<8x8xf32>
    %c0_35 = arith.constant 0 : index
    %c16 = arith.constant 16 : index
    %67 = vector.load %arg7[%c0_35, %c16] : memref<8x32xf32, #tpu.memory_space<vmem>>, vector<8x8xf32>
    tpu.vector_store %arg7[%c0_35, %c16], %66 {strides = array<i32>} : memref<8x32xf32, #tpu.memory_space<vmem>>, vector<8x8xf32>,
    %c3 = arith.constant 3 : index
    %c0_36 = arith.constant 0 : index
    %c0_37 = arith.constant 0 : index
    %68 = vector.load %arg2[%c3, %c0_36, %c0_37] : memref<4x32x24xf32, #tpu.memory_space<vmem>>, vector<1x32x24xf32>
    %69 = vector.shape_cast %68 : vector<1x32x24xf32> to vector<32x24xf32>
    %cst_38 = arith.constant dense<0.000000e+00> : vector<8x24xf32>
    %70 = tpu.matmul %1, %69, %cst_38 {dimension_numbers = #tpu.dot_dimension_numbers<[1], [0], [0], [1], [0, 0, 1, 1], [], []>} : vector<8x32xf32>, vector<32x24xf32>, vector<8x24xf32> -> vector<8x24xf32>
    %c3_39 = arith.constant 3 : index
    %c0_40 = arith.constant 0 : index
    %c0_41 = arith.constant 0 : index
    %71 = vector.load %arg3[%c3_39, %c0_40, %c0_41] : memref<4x1x24xf32, #tpu.memory_space<vmem>>, vector<1x1x24xf32>
    %72 = vector.shape_cast %71 : vector<1x1x24xf32> to vector<1x24xf32>
    %73 = vector.broadcast %72 : vector<1x24xf32> to vector<8x24xf32>
    %74 = arith.addf %70, %73 : vector<8x24xf32>
    %75 = vector.extract_strided_slice %74 {offsets = [0, 0], sizes = [8, 8], strides = [1, 1]} : vector<8x24xf32> to vector<8x8xf32>
    %76 = vector.extract_strided_slice %74 {offsets = [0, 8], sizes = [8, 8], strides = [1, 1]} : vector<8x24xf32> to vector<8x8xf32>
    %77 = vector.extract_strided_slice %74 {offsets = [0, 16], sizes = [8, 8], strides = [1, 1]} : vector<8x24xf32> to vector<8x8xf32>
    %cst_42 = arith.constant dense<0.000000e+00> : vector<8x8xf32>
    %78 = tpu.matmul %75, %76, %cst_42 {dimension_numbers = #tpu.dot_dimension_numbers<[1], [1], [0], [0], [0, 0, 1, 0], [], []>} : vector<8x8xf32>, vector<8x8xf32>, vector<8x8xf32> -> vector<8x8xf32>
    %cst_43 = arith.constant dense<0xFF800000> : vector<8xf32>
    %79 = vector.multi_reduction <maximumf>, %78, %cst_43 [1] : vector<8x8xf32> to vector<8xf32>
    %80 = vector.shape_cast %79 : vector<8xf32> to vector<8x1xf32>
    %81 = vector.broadcast %80 : vector<8x1xf32> to vector<8x8xf32>
    %82 = arith.subf %78, %81 : vector<8x8xf32>
    %83 = math.exp %82 : vector<8x8xf32>
    %cst_44 = arith.constant dense<0.000000e+00> : vector<8xf32>
    %84 = vector.multi_reduction <add>, %83, %cst_44 [1] : vector<8x8xf32> to vector<8xf32>
    %85 = vector.shape_cast %84 : vector<8xf32> to vector<8x1xf32>
    %86 = vector.broadcast %85 : vector<8x1xf32> to vector<8x8xf32>
    %87 = arith.divf %83, %86 : vector<8x8xf32>
    %cst_45 = arith.constant dense<0.000000e+00> : vector<8x8xf32>
    %88 = tpu.matmul %87, %77, %cst_45 {dimension_numbers = #tpu.dot_dimension_numbers<[1], [0], [0], [1], [0, 0, 1, 1], [], []>} : vector<8x8xf32>, vector<8x8xf32>, vector<8x8xf32> -> vector<8x8xf32>
    %c0_46 = arith.constant 0 : index
    %c24 = arith.constant 24 : index
    %89 = vector.load %arg7[%c0_46, %c24] : memref<8x32xf32, #tpu.memory_space<vmem>>, vector<8x8xf32>
    tpu.vector_store %arg7[%c0_46, %c24], %88 {strides = array<i32>} : memref<8x32xf32, #tpu.memory_space<vmem>>, vector<8x8xf32>,
    %c0_47 = arith.constant 0 : index
    %c0_48 = arith.constant 0 : index
    %90 = vector.load %arg7[%c0_47, %c0_48] : memref<8x32xf32, #tpu.memory_space<vmem>>, vector<8x32xf32>
    %c0_49 = arith.constant 0 : index
    %c0_50 = arith.constant 0 : index
    %91 = vector.load %arg4[%c0_49, %c0_50] : memref<32x32xf32, #tpu.memory_space<vmem>>, vector<32x32xf32>
    %cst_51 = arith.constant dense<0.000000e+00> : vector<8x32xf32>
    %92 = tpu.matmul %90, %91, %cst_51 {dimension_numbers = #tpu.dot_dimension_numbers<[1], [0], [0], [1], [0, 0, 1, 1], [], []>} : vector<8x32xf32>, vector<32x32xf32>, vector<8x32xf32> -> vector<8x32xf32>
    %c0_52 = arith.constant 0 : index
    %c0_53 = arith.constant 0 : index
    %93 = vector.load %arg5[%c0_52, %c0_53] : memref<1x32xf32, #tpu.memory_space<vmem>>, vector<1x32xf32>
    %94 = vector.broadcast %93 : vector<1x32xf32> to vector<8x32xf32>
    %95 = arith.addf %92, %94 : vector<8x32xf32>
    %c0_54 = arith.constant 0 : index
    %c0_55 = arith.constant 0 : index
    %c0_56 = arith.constant 0 : index
    %96 = vector.load %arg6[%c0_54, %c0_55, %c0_56] : memref<1x8x32xf32, #tpu.memory_space<vmem>>, vector<1x8x32xf32>
    %97 = vector.shape_cast %96 : vector<1x8x32xf32> to vector<8x32xf32>
    %98 = vector.shape_cast %95 : vector<8x32xf32> to vector<1x8x32xf32>
    tpu.vector_store %arg6[%c0_54, %c0_55, %c0_56], %98 {strides = array<i32>} : memref<1x8x32xf32, #tpu.memory_space<vmem>>, vector<1x8x32xf32>,
    return
  }
  func.func @transform_0(%arg0: i32) -> (i32, i32, i32) {
    %c0_i32 = arith.constant 0 : i32
    %c0_i32_0 = arith.constant 0 : i32
    %c0_i32_1 = arith.constant 0 : i32
    return %arg0, %c0_i32, %c0_i32_0 : i32, i32, i32
  }
  func.func @transform_1(%arg0: i32) -> (i32, i32, i32) {
    %c0_i32 = arith.constant 0 : i32
    %c0_i32_0 = arith.constant 0 : i32
    %c0_i32_1 = arith.constant 0 : i32
    %c0_i32_2 = arith.constant 0 : i32
    return %c0_i32, %c0_i32_0, %c0_i32_1 : i32, i32, i32
  }
  func.func @transform_2(%arg0: i32) -> (i32, i32, i32) {
    %c0_i32 = arith.constant 0 : i32
    %c0_i32_0 = arith.constant 0 : i32
    %c0_i32_1 = arith.constant 0 : i32
    %c0_i32_2 = arith.constant 0 : i32
    return %c0_i32, %c0_i32_0, %c0_i32_1 : i32, i32, i32
  }
  func.func @transform_3(%arg0: i32) -> (i32, i32) {
    %c0_i32 = arith.constant 0 : i32
    %c0_i32_0 = arith.constant 0 : i32
    %c0_i32_1 = arith.constant 0 : i32
    return %c0_i32, %c0_i32_0 : i32, i32
  }
  func.func @transform_4(%arg0: i32) -> (i32, i32) {
    %c0_i32 = arith.constant 0 : i32
    %c0_i32_0 = arith.constant 0 : i32
    %c0_i32_1 = arith.constant 0 : i32
    return %c0_i32, %c0_i32_0 : i32, i32
  }
  func.func @transform_5(%arg0: i32) -> (i32, i32, i32) {
    %c0_i32 = arith.constant 0 : i32
    %c0_i32_0 = arith.constant 0 : i32
    %c0_i32_1 = arith.constant 0 : i32
    return %arg0, %c0_i32, %c0_i32_0 : i32, i32, i32
  }
}

</mosaic_0001>

<llo_original>
// kernel: tpu_custom_call.1
$region0: #{tpu_custom_call.1}
  #allocation0 [shape = 'u32[]', space=smem, size = 0x4, offset = 0x4, fixed_abs, tag = 'smem constant byte address 0x4 - core index']
  #allocation1 [shape = 'u32[144,128]{1,0:T(1,128)}', space=vmem, size = 0x12000, scoped, tag = 'internal scratch']
  #allocation2 [shape = 'f32[8,32]{1,0:T(8,128)}', space=vmem, size = 0x1000, scoped, tag = 'scratch operand']
  %s0 = inlined_call_operand.vmem [shape: f32[2,8,32], index: 0, kind: input, shape index: {}]
  %s1 = inlined_call_operand.vmem [shape: f32[4,32,24], index: 1, kind: input, shape index: {}]
  %s2 = inlined_call_operand.vmem [shape: f32[4,1,24], index: 2, kind: input, shape index: {}]
  %s3 = inlined_call_operand.vmem [shape: f32[32,32], index: 3, kind: input, shape index: {}]
  %s4 = inlined_call_operand.vmem [shape: f32[1,32], index: 4, kind: input, shape index: {}]
  %s5 = inlined_call_operand.hbm [shape: f32[2,8,32], index: 5, kind: output, shape index: {}]
  %s6 = sld [smem:[#allocation0]]
  $region53: #{tpu_custom_call.1} parent=0
    _
  %s8 = ssub.s32 1, %s6
  %s9 = scalar_select 0, %s8, %s6
  $region1: #{tpu_custom_call.1} parent=0
    #allocation3 [shape = 'u8[8192]{0}', space=vmem, size = 0x2000, scoped, tag = 'output window, operand 0']
    #allocation4 [shape = 's32[2]{0}', space=sflag, size = 0x8, scoped, tag = 'scoped memory for tpu_custom_call.1']
    %10 = vsyncpa [#allocation4], 0
    %s11 = scalar_lea.sflag [#allocation4], 1
    %12 = vsyncpa %s11, 0
    loop: start=0, step=1, limit=4
    $region2: #{tpu_custom_call.1} parent=1 // loop_pre_header
      _
    $region3: #{tpu_custom_call.1} parent=1 // loop_header
      %s14 = sphi 0, %s18
      %p15 = scmp.ge.s32.totalorder %s14, 4
      %s24 = sphi 0, %s26
      %s27 = sphi 0, %s24
      %s28 = sphi 0, %s27
      %s44 = sphi 0, %s28
      %s48 = sphi 0, %s48
      %s50 = sphi 0, %s48
      %s51 = sphi 0, %s50
      %s65 = sphi 0, %s51
      %s69 = sphi 0, %s69
      %s71 = sphi 0, %s69
      %s72 = sphi 0, %s71
      %s86 = sphi 0, %s72
      %s90 = sphi 0, %s90
      %s92 = sphi 0, %s90
      %s93 = sphi 0, %s92
      %s107 = sphi 0, %s93
      %s111 = sphi 0, %s111
      %s113 = sphi 0, %s111
      %s114 = sphi 0, %s113
      %s128 = sphi 0, %s114
      %s134 = sphi 0, %s136
      %s137 = sphi 0, %s134
      %s138 = sphi 0, %s137
      %s154 = sphi 0, %s138
    $region4: #{tpu_custom_call.1} parent=1 // loop_header_branch
      %17 = sbr.rel (%p15) target = $region8
    $region5: #{tpu_custom_call.1} parent=1 // loop_body
      %s19 = ssub.s32 %s14, 1
      %s20 = ssub.s32 %s14, 2
      %s21 = sadd.s32 %s14, 1
      %s22 = ssub.s32 %s14, %s21
      %p23 = scmp.eq.s32.totalorder %s22, 0
      %s25 = sadd.s32 %s24, 1
      %s26 = scalar_select %p23, %s24, %s25
      %p29 = pneg %p23
      %p30 = scmp.eq.s32.totalorder %s14, 1
      %p31 = por %p29, %p30
      %p32 = scmp.ne.s32.totalorder %s24, %s27
      %p33 = scmp.eq.s32.totalorder %s14, 0
      %p34 = por %p32, %p33
      %p35 = scmp.ne.s32.totalorder %s24, %s27
      %p36 = scmp.eq.s32.totalorder %s19, 1
      %p37 = por %p35, %p36
      %p38 = scmp.ne.s32.totalorder %s27, %s28
      %p39 = scmp.eq.s32.totalorder %s19, 0
      %p40 = por %p38, %p39
      %p41 = scmp.ne.s32.totalorder %s27, %s28
      %p42 = scmp.eq.s32.totalorder %s20, 1
      %p43 = por %p41, %p42
      %p45 = scmp.ne.s32.totalorder %s28, %s44
      %p46 = scmp.eq.s32.totalorder %s20, 0
      %p47 = por %p45, %p46
      %s49 = sadd.s32 %s48, 1
      %p52 = scmp.eq.s32.totalorder %s14, 1
      %p53 = scmp.ne.s32.totalorder %s48, %s50
      %p54 = scmp.eq.s32.totalorder %s14, 0
      %p55 = por %p53, %p54
      %p56 = scmp.ne.s32.totalorder %s48, %s50
      %p57 = scmp.eq.s32.totalorder %s19, 1
      %p58 = por %p56, %p57
      %p59 = scmp.ne.s32.totalorder %s50, %s51
      %p60 = scmp.eq.s32.totalorder %s19, 0
      %p61 = por %p59, %p60
      %p62 = scmp.ne.s32.totalorder %s50, %s51
      %p63 = scmp.eq.s32.totalorder %s20, 1
      %p64 = por %p62, %p63
      %p66 = scmp.ne.s32.totalorder %s51, %s65
      %p67 = scmp.eq.s32.totalorder %s20, 0
      %p68 = por %p66, %p67
      %s70 = sadd.s32 %s69, 1
      %p73 = scmp.eq.s32.totalorder %s14, 1
      %p74 = scmp.ne.s32.totalorder %s69, %s71
      %p75 = scmp.eq.s32.totalorder %s14, 0
      %p76 = por %p74, %p75
      %p77 = scmp.ne.s32.totalorder %s69, %s71
      %p78 = scmp.eq.s32.totalorder %s19, 1
      %p79 = por %p77, %p78
      %p80 = scmp.ne.s32.totalorder %s71, %s72
      %p81 = scmp.eq.s32.totalorder %s19, 0
      %p82 = por %p80, %p81
      %p83 = scmp.ne.s32.totalorder %s71, %s72
      %p84 = scmp.eq.s32.totalorder %s20, 1
      %p85 = por %p83, %p84
      %p87 = scmp.ne.s32.totalorder %s72, %s86
      %p88 = scmp.eq.s32.totalorder %s20, 0
      %p89 = por %p87, %p88
      %s91 = sadd.s32 %s90, 1
      %p94 = scmp.eq.s32.totalorder %s14, 1
      %p95 = scmp.ne.s32.totalorder %s90, %s92
      %p96 = scmp.eq.s32.totalorder %s14, 0
      %p97 = por %p95, %p96
      %p98 = scmp.ne.s32.totalorder %s90, %s92
      %p99 = scmp.eq.s32.totalorder %s19, 1
      %p100 = por %p98, %p99
      %p101 = scmp.ne.s32.totalorder %s92, %s93
      %p102 = scmp.eq.s32.totalorder %s19, 0
      %p103 = por %p101, %p102
      %p104 = scmp.ne.s32.totalorder %s92, %s93
      %p105 = scmp.eq.s32.totalorder %s20, 1
      %p106 = por %p104, %p105
      %p108 = scmp.ne.s32.totalorder %s93, %s107
      %p109 = scmp.eq.s32.totalorder %s20, 0
      %p110 = por %p108, %p109
      %s112 = sadd.s32 %s111, 1
      %p115 = scmp.eq.s32.totalorder %s14, 1
      %p116 = scmp.ne.s32.totalorder %s111, %s113
      %p117 = scmp.eq.s32.totalorder %s14, 0
      %p118 = por %p116, %p117
      %p119 = scmp.ne.s32.totalorder %s111, %s113
      %p120 = scmp.eq.s32.totalorder %s19, 1
      %p121 = por %p119, %p120
      %p122 = scmp.ne.s32.totalorder %s113, %s114
      %p123 = scmp.eq.s32.totalorder %s19, 0
      %p124 = por %p122, %p123
      %p125 = scmp.ne.s32.totalorder %s113, %s114
      %p126 = scmp.eq.s32.totalorder %s20, 1
      %p127 = por %p125, %p126
      %p129 = scmp.ne.s32.totalorder %s114, %s128
      %p130 = scmp.eq.s32.totalorder %s20, 0
      %p131 = por %p129, %p130
      %s132 = ssub.s32 %s14, %s21
      %p133 = scmp.eq.s32.totalorder %s132, 0
      %s135 = sadd.s32 %s134, 1
      %s136 = scalar_select %p133, %s134, %s135
      %p139 = pneg %p133
      %p140 = scmp.eq.s32.totalorder %s14, 1
      %p141 = por %p139, %p140
      %p142 = scmp.ne.s32.totalorder %s134, %s137
      %p143 = scmp.eq.s32.totalorder %s14, 0
      %p144 = por %p142, %p143
      %p145 = scmp.ne.s32.totalorder %s134, %s137
      %p146 = scmp.eq.s32.totalorder %s19, 1
      %p147 = por %p145, %p146
      %p148 = scmp.ne.s32.totalorder %s137, %s138
      %p149 = scmp.eq.s32.totalorder %s19, 0
      %p150 = por %p148, %p149
      %p151 = scmp.ne.s32.totalorder %s137, %s138
      %p152 = scmp.eq.s32.totalorder %s20, 1
      %p153 = por %p151, %p152
      %p155 = scmp.ne.s32.totalorder %s138, %s154
      %p156 = scmp.eq.s32.totalorder %s20, 0
      %p157 = por %p155, %p156
      %p158 = scmp.le.s32.totalorder 1, %s14
      %p159 = scmp.lt.s32.totalorder %s14, 3
      %p160 = pnand %p158, %p159
      %p161 = pneg %p160
      // Predicated region
      $region9: #{tpu_custom_call.1} parent=5 // pred_check
        _
      $region10: #{tpu_custom_call.1} parent=5 // pred_check_branch
        %163 = sbr.rel (%p160) target = $region12
      $region11: #{tpu_custom_call.1} parent=5 // pred_region
        %s164 = ssub.s32 %s14, 1
        // Predicated region
        $region13: #{tpu_custom_call.1} parent=11 // pred_check
          %p165 = pneg %p61
        $region14: #{tpu_custom_call.1} parent=11 // pred_check_branch
          %167 = sbr.rel (%p165) target = $region16
        $region15: #{tpu_custom_call.1} parent=11 // pred_region
          _
        $region16: #{tpu_custom_call.1} parent=11 // pred_fallthru
          _
        // Predicated region
        $region17: #{tpu_custom_call.1} parent=11 // pred_check
          %p168 = pneg %p82
        $region18: #{tpu_custom_call.1} parent=11 // pred_check_branch
          %170 = sbr.rel (%p168) target = $region20
        $region19: #{tpu_custom_call.1} parent=11 // pred_region
          _
        $region20: #{tpu_custom_call.1} parent=11 // pred_fallthru
          _
        // Predicated region
        $region21: #{tpu_custom_call.1} parent=11 // pred_check
          %p171 = pneg %p103
        $region22: #{tpu_custom_call.1} parent=11 // pred_check_branch
          %173 = sbr.rel (%p171) target = $region24
        $region23: #{tpu_custom_call.1} parent=11 // pred_region
          _
        $region24: #{tpu_custom_call.1} parent=11 // pred_fallthru
          _
        // Predicated region
        $region25: #{tpu_custom_call.1} parent=11 // pred_check
          %p174 = pneg %p124
        $region26: #{tpu_custom_call.1} parent=11 // pred_check_branch
          %176 = sbr.rel (%p174) target = $region28
        $region27: #{tpu_custom_call.1} parent=11 // pred_region
          _
        $region28: #{tpu_custom_call.1} parent=11 // pred_fallthru
          _
      $region12: #{tpu_custom_call.1} parent=5 // pred_fallthru
        _
      %p177 = scmp.lt.s32.totalorder %s14, 2
      // Predicated region
      $region29: #{tpu_custom_call.1} parent=5 // pred_check
        %p178 = pneg %p177
      $region30: #{tpu_custom_call.1} parent=5 // pred_check_branch
        %180 = sbr.rel (%p178) target = $region32
      $region31: #{tpu_custom_call.1} parent=5 // pred_region
        // Predicated region
        $region33: #{tpu_custom_call.1} parent=31 // pred_check
          %p181 = pneg %p34
        $region34: #{tpu_custom_call.1} parent=31 // pred_check_branch
          %183 = sbr.rel (%p181) target = $region36
        $region35: #{tpu_custom_call.1} parent=31 // pred_region
          %p184 = scmp.lt.s32.totalorder %s14, 1
          %s185 = scalar_select %p184, %s14, 1
          %s186 = smul.addr %s185, 8
          %s187 = scalar_lea.vmem %s0, %s186
        $region36: #{tpu_custom_call.1} parent=31 // pred_fallthru
          _
      $region32: #{tpu_custom_call.1} parent=5 // pred_fallthru
        _
      %p188 = scmp.le.s32.totalorder 1, %s14
      %p189 = scmp.lt.s32.totalorder %s14, 3
      %p190 = pnand %p188, %p189
      %p191 = pneg %p190
      // Predicated region
      $region37: #{tpu_custom_call.1} parent=5 // pred_check
        _
      $region38: #{tpu_custom_call.1} parent=5 // pred_check_branch
        %193 = sbr.rel (%p190) target = $region40
      $region39: #{tpu_custom_call.1} parent=5 // pred_region
        %s194 = ssub.s32 %s14, 1
        %p195 = scmp.lt.s32.totalorder %s19, 1
        %s196 = scalar_select %p195, %s19, 1
        %s197 = smul.addr %s196, 8
        %s198 = scalar_lea.vmem %s0, %s197
        %p199 = pneg %p40
        %p200 = pneg %p37
        %p201 = pneg %p61
        %p202 = pneg %p58
        %p203 = pneg %p82
        %p204 = pneg %p79
        %p205 = pneg %p103
        %p206 = pneg %p100
        %p207 = pneg %p124
        %p208 = pneg %p121
        %p209 = pneg %p150
        %p210 = pneg %p147
        %s211 = sand.u32 %s137, 1
        %s212 = scalar_lea.sflag [#allocation4], %s211
        %s213 = sand.u32 %s137, 1
        %s214 = smul.addr %s213, 8
        %s215 = scalar_lea.vmem [#allocation3], %s214
        %p216 = scmp.lt.s32.totalorder %s19, 1
        %s217 = scalar_select %p216, %s19, 1
        %s218 = smul.addr %s217, 8
        %s219 = scalar_lea.vmem %s0, %s218
        %v220 = vld [vmem:[%s219] sm:$0xff]
        %v221 = vld [vmem:[%s1] sm:$0xff]
        %v222 = vld [vmem:[%s1 + $0x8] sm:$0xff]
        %v223 = vld [vmem:[%s1 + $0x10] sm:$0xff]
        %v224 = vld [vmem:[%s1 + $0x18] sm:$0xff]
        %v225 = vld [vmem:[%s2] sm:$0x1]
        %v227 = vlaneseq
        %v228 = vshrl.u32 %v227, 7
        %v229 = vsub.s32 0, %v228
        %v230 = vrot.slane %v225, %v229
        %vm232 = vcmask 261120
        %v234 = vsel %vm232, %v220, 0
        %236 = vmatprep.subr.mxu0 0.0
        %237 = vmatpush1.msra.mxu0 %v221
        %238 = vmatprep.subr.mxu0 0.0
        %239 = vmatpush1.msra.mxu0 %v222
        %240 = vmatprep.subr.mxu0 0.0
        %241 = vmatpush1.msra.mxu0 %v223
        %242 = vmatprep.subr.mxu0 0.0
        %243 = vmatpush1.msra.mxu0 %v224
        %244 = vmatprep.subr.mxu0 0.0
        %245 = vmatpush1.msra.mxu0 0.0
        %246 = vmatprep.subr.mxu0 0.0
        %247 = vmatpush1.msra.mxu0 0.0
        %248 = vmatprep.subr.mxu0 0.0
        %249 = vmatpush1.msra.mxu0 0.0
        %250 = vmatprep.subr.mxu0 0.0
        %251 = vmatpush1.msra.mxu0 0.0
        %252 = vmatprep.subr.mxu0 0.0
        %253 = vmatpush1.msra.mxu0 0.0
        %254 = vmatprep.subr.mxu0 0.0
        %255 = vmatpush1.msra.mxu0 0.0
        %256 = vmatprep.subr.mxu0 0.0
        %257 = vmatpush1.msra.mxu0 0.0
        %258 = vmatprep.subr.mxu0 0.0
        %259 = vmatpush1.msra.mxu0 0.0
        %260 = vmatprep.subr.mxu0 0.0
        %261 = vmatpush1.msra.mxu0 0.0
        %262 = vmatprep.subr.mxu0 0.0
        %263 = vmatpush1.msra.mxu0 0.0
        %264 = vmatprep.subr.mxu0 0.0
        %265 = vmatpush1.msra.mxu0 0.0
        %266 = vmatprep.subr.mxu0 0.0
        %267 = vmatpush1.msra.mxu0 0.0
        %268 = vmatprep.subr.mxu0 0.0
        %269 = vmatpush1.msra.mxu0 0.0
        %270 = vmatprep.subr.mxu0 0.0
        %271 = vmatpush1.msra.mxu0 0.0
        %272 = vmatprep.subr.mxu0 0.0
        %273 = vmatpush1.msra.mxu0 0.0
        %274 = vmatprep.subr.mxu0 0.0
        %275 = vmatpush1.msra.mxu0 0.0
        %276 = vmatprep.subr.mxu0 0.0
        %277 = vmatpush1.msra.mxu0 0.0
        %278 = vmatprep.subr.mxu0 0.0
        %279 = vmatpush1.msra.mxu0 0.0
        %280 = vmatprep.subr.mxu0 0.0
        %281 = vmatpush1.msra.mxu0 0.0
        %282 = vmatprep.subr.mxu0 0.0
        %283 = vmatpush1.msra.mxu0 0.0
        %284 = vmatprep.subr.mxu0 0.0
        %285 = vmatpush1.msra.mxu0 0.0
        %286 = vmatprep.subr.mxu0 0.0
        %287 = vmatpush1.msra.mxu0 0.0
        %288 = vmatprep.subr.mxu0 0.0
        %289 = vmatpush1.msra.mxu0 0.0
        %290 = vmatprep.subr.mxu0 0.0
        %291 = vmatpush1.msra.mxu0 0.0
        %292 = vmatprep.subr.mxu0 0.0
        %293 = vmatpush1.msra.mxu0 0.0
        %294 = vmatprep.subr.mxu0 0.0
        %295 = vmatpush1.msra.mxu0 0.0
        %296 = vmatprep.subr.mxu0 0.0
        %297 = vmatpush1.msra.mxu0 0.0
        %298 = vmatprep.subr.mxu0 0.0
        %299 = vmatpush1.msra.mxu0 0.0
        %300 = vmatprep.mubr.f32.mxu0 0.0
        %301 = vmatmul.mubr.f32.gmra.mrb[0].mxu0 %v234
        %v302 = vpop.f32.mrb[0].mxu0
        %v303 = vadd.f32 %v230, %v302
        %v304 = vpop.f32.mrb[0].mxu0
        %305 = vdwg.mxu0
        %307 = vrot.lane.b32.xlu0 %v303, 120
        %v308 = vpop.permute.xlu0 %307
        %vm309 = vcmask 64512
        %v310 = vsel %vm309, %v303, 0
        %v312 = vsel %vm309, %v308, 0
        %314 = vmatprep.subr.mxu0 0.0
        %315 = vmatpush1.xpose.msra.mxu0 %v312
        %316 = vmatprep.subr.mxu0 0.0
        %317 = vmatpush1.xpose.msra.mxu0 0.0
        %318 = vmatprep.subr.mxu0 0.0
        %319 = vmatpush1.xpose.msra.mxu0 0.0
        %320 = vmatprep.subr.mxu0 0.0
        %321 = vmatpush1.xpose.msra.mxu0 0.0
        %322 = vmatprep.subr.mxu0 0.0
        %323 = vmatpush1.xpose.msra.mxu0 0.0
        %324 = vmatprep.subr.mxu0 0.0
        %325 = vmatpush1.xpose.msra.mxu0 0.0
        %326 = vmatprep.subr.mxu0 0.0
        %327 = vmatpush1.xpose.msra.mxu0 0.0
        %328 = vmatprep.subr.mxu0 0.0
        %329 = vmatpush1.xpose.msra.mxu0 0.0
        %330 = vmatprep.subr.mxu0 0.0
        %331 = vmatpush1.xpose.msra.mxu0 0.0
        %332 = vmatprep.subr.mxu0 0.0
        %333 = vmatpush1.xpose.msra.mxu0 0.0
        %334 = vmatprep.subr.mxu0 0.0
        %335 = vmatpush1.xpose.msra.mxu0 0.0
        %336 = vmatprep.subr.mxu0 0.0
        %337 = vmatpush1.xpose.msra.mxu0 0.0
        %338 = vmatprep.subr.mxu0 0.0
        %339 = vmatpush1.xpose.msra.mxu0 0.0
        %340 = vmatprep.subr.mxu0 0.0
        %341 = vmatpush1.xpose.msra.mxu0 0.0
        %342 = vmatprep.subr.mxu0 0.0
        %343 = vmatpush1.xpose.msra.mxu0 0.0
        %344 = vmatprep.subr.mxu0 0.0
        %345 = vmatpush1.xpose.msra.mxu0 0.0
        %346 = vmatprep.subr.mxu0 0.0
        %347 = vmatpush1.xpose.msra.mxu0 0.0
        %348 = vmatprep.subr.mxu0 0.0
        %349 = vmatpush1.xpose.msra.mxu0 0.0
        %350 = vmatprep.subr.mxu0 0.0
        %351 = vmatpush1.xpose.msra.mxu0 0.0
        %352 = vmatprep.subr.mxu0 0.0
        %353 = vmatpush1.xpose.msra.mxu0 0.0
        %354 = vmatprep.subr.mxu0 0.0
        %355 = vmatpush1.xpose.msra.mxu0 0.0
        %356 = vmatprep.subr.mxu0 0.0
        %357 = vmatpush1.xpose.msra.mxu0 0.0
        %358 = vmatprep.subr.mxu0 0.0
        %359 = vmatpush1.xpose.msra.mxu0 0.0
        %360 = vmatprep.subr.mxu0 0.0
        %361 = vmatpush1.xpose.msra.mxu0 0.0
        %362 = vmatprep.subr.mxu0 0.0
        %363 = vmatpush1.xpose.msra.mxu0 0.0
        %364 = vmatprep.subr.mxu0 0.0
        %365 = vmatpush1.xpose.msra.mxu0 0.0
        %366 = vmatprep.subr.mxu0 0.0
        %367 = vmatpush1.xpose.msra.mxu0 0.0
        %368 = vmatprep.subr.mxu0 0.0
        %369 = vmatpush1.xpose.msra.mxu0 0.0
        %370 = vmatprep.subr.mxu0 0.0
        %371 = vmatpush1.xpose.msra.mxu0 0.0
        %372 = vmatprep.subr.mxu0 0.0
        %373 = vmatpush1.xpose.msra.mxu0 0.0
        %374 = vmatprep.subr.mxu0 0.0
        %375 = vmatpush1.xpose.msra.mxu0 0.0
        %376 = vmatprep.subr.mxu0 0.0
        %377 = vmatpush1.xpose.msra.mxu0 0.0
        %378 = vmatprep.mubr.f32.mxu0 0.0
        %379 = vmatmul.mubr.f32.gmra.mrb[0].mxu0 %v310
        %v380 = vpop.f32.mrb[0].mxu0
        %v381 = vadd.f32 0.0, %v380
        %v382 = vpop.f32.mrb[0].mxu0
        %383 = vdwg.mxu0
        %v384 = vsel %vm309, %v381, -inf
        %385 = vmax.xlane.f32.xlu0 %v384
        %v386 = vpop.xlane.xlu0 %385
        %v387 = vsub.f32 %v381, %v386
        %v388 = vmul.f32 %v387, 1.442695
        %v389 = vpow.pop %v388
        %v390 = vsel %vm309, %v389, 0.0
        %391 = vadd.xlane.f32.xlu0 %v390
        %v392 = vpop.xlane.xlu0 %391
        %v393 = vrcp.pop %v392
        %v394 = vmul.f32 %v389, %v393
        %395 = vrot.lane.b32.xlu0 %v303, 112
        %v396 = vpop.permute.xlu0 %395
        %v399 = vsel %vm309, %v394, 0
        %401 = vmatprep.subr.mxu0 0.0
        %402 = vmatpush1.msra.mxu0 %v396
        %403 = vmatprep.subr.mxu0 0.0
        %404 = vmatpush1.msra.mxu0 0.0
        %405 = vmatprep.subr.mxu0 0.0
        %406 = vmatpush1.msra.mxu0 0.0
        %407 = vmatprep.subr.mxu0 0.0
        %408 = vmatpush1.msra.mxu0 0.0
        %409 = vmatprep.subr.mxu0 0.0
        %410 = vmatpush1.msra.mxu0 0.0
        %411 = vmatprep.subr.mxu0 0.0
        %412 = vmatpush1.msra.mxu0 0.0
        %413 = vmatprep.subr.mxu0 0.0
        %414 = vmatpush1.msra.mxu0 0.0
        %415 = vmatprep.subr.mxu0 0.0
        %416 = vmatpush1.msra.mxu0 0.0
        %417 = vmatprep.subr.mxu0 0.0
        %418 = vmatpush1.msra.mxu0 0.0
        %419 = vmatprep.subr.mxu0 0.0
        %420 = vmatpush1.msra.mxu0 0.0
        %421 = vmatprep.subr.mxu0 0.0
        %422 = vmatpush1.msra.mxu0 0.0
        %423 = vmatprep.subr.mxu0 0.0
        %424 = vmatpush1.msra.mxu0 0.0
        %425 = vmatprep.subr.mxu0 0.0
        %426 = vmatpush1.msra.mxu0 0.0
        %427 = vmatprep.subr.mxu0 0.0
        %428 = vmatpush1.msra.mxu0 0.0
        %429 = vmatprep.subr.mxu0 0.0
        %430 = vmatpush1.msra.mxu0 0.0
        %431 = vmatprep.subr.mxu0 0.0
        %432 = vmatpush1.msra.mxu0 0.0
        %433 = vmatprep.subr.mxu0 0.0
        %434 = vmatpush1.msra.mxu0 0.0
        %435 = vmatprep.subr.mxu0 0.0
        %436 = vmatpush1.msra.mxu0 0.0
        %437 = vmatprep.subr.mxu0 0.0
        %438 = vmatpush1.msra.mxu0 0.0
        %439 = vmatprep.subr.mxu0 0.0
        %440 = vmatpush1.msra.mxu0 0.0
        %441 = vmatprep.subr.mxu0 0.0
        %442 = vmatpush1.msra.mxu0 0.0
        %443 = vmatprep.subr.mxu0 0.0
        %444 = vmatpush1.msra.mxu0 0.0
        %445 = vmatprep.subr.mxu0 0.0
        %446 = vmatpush1.msra.mxu0 0.0
        %447 = vmatprep.subr.mxu0 0.0
        %448 = vmatpush1.msra.mxu0 0.0
        %449 = vmatprep.subr.mxu0 0.0
        %450 = vmatpush1.msra.mxu0 0.0
        %451 = vmatprep.subr.mxu0 0.0
        %452 = vmatpush1.msra.mxu0 0.0
        %453 = vmatprep.subr.mxu0 0.0
        %454 = vmatpush1.msra.mxu0 0.0
        %455 = vmatprep.subr.mxu0 0.0
        %456 = vmatpush1.msra.mxu0 0.0
        %457 = vmatprep.subr.mxu0 0.0
        %458 = vmatpush1.msra.mxu0 0.0
        %459 = vmatprep.subr.mxu0 0.0
        %460 = vmatpush1.msra.mxu0 0.0
        %461 = vmatprep.subr.mxu0 0.0
        %462 = vmatpush1.msra.mxu0 0.0
        %463 = vmatprep.subr.mxu0 0.0
        %464 = vmatpush1.msra.mxu0 0.0
        %465 = vmatprep.mubr.f32.mxu0 0.0
        %466 = vmatmul.mubr.f32.gmra.mrb[0].mxu0 %v399
        %v467 = vpop.f32.mrb[0].mxu0
        %v468 = vadd.f32 0.0, %v467
        %v469 = vpop.f32.mrb[0].mxu0
        %470 = vdwg.mxu0
        %471 = vst.msk [vmem:[#allocation2] sm:$0xff] %vm309, %v468
        %s472 = scalar_lea.vmem %s1, 32
        %v473 = vld [vmem:[%s472] sm:$0xff]
        %v474 = vld [vmem:[%s472 + $0x8] sm:$0xff]
        %v475 = vld [vmem:[%s472 + $0x10] sm:$0xff]
        %v476 = vld [vmem:[%s472 + $0x18] sm:$0xff]
        %s477 = scalar_lea.vmem %s2, 1
        %v478 = vld [vmem:[%s477] sm:$0x1]
        %v480 = vlaneseq
        %v481 = vshrl.u32 %v480, 7
        %v482 = vsub.s32 0, %v481
        %v483 = vrot.slane %v478, %v482
        %485 = vmatprep.subr.mxu0 0.0
        %486 = vmatpush1.msra.mxu0 %v473
        %487 = vmatprep.subr.mxu0 0.0
        %488 = vmatpush1.msra.mxu0 %v474
        %489 = vmatprep.subr.mxu0 0.0
        %490 = vmatpush1.msra.mxu0 %v475
        %491 = vmatprep.subr.mxu0 0.0
        %492 = vmatpush1.msra.mxu0 %v476
        %493 = vmatprep.subr.mxu0 0.0
        %494 = vmatpush1.msra.mxu0 0.0
        %495 = vmatprep.subr.mxu0 0.0
        %496 = vmatpush1.msra.mxu0 0.0
        %497 = vmatprep.subr.mxu0 0.0
        %498 = vmatpush1.msra.mxu0 0.0
        %499 = vmatprep.subr.mxu0 0.0
        %500 = vmatpush1.msra.mxu0 0.0
        %501 = vmatprep.subr.mxu0 0.0
        %502 = vmatpush1.msra.mxu0 0.0
        %503 = vmatprep.subr.mxu0 0.0
        %504 = vmatpush1.msra.mxu0 0.0
        %505 = vmatprep.subr.mxu0 0.0
        %506 = vmatpush1.msra.mxu0 0.0
        %507 = vmatprep.subr.mxu0 0.0
        %508 = vmatpush1.msra.mxu0 0.0
        %509 = vmatprep.subr.mxu0 0.0
        %510 = vmatpush1.msra.mxu0 0.0
        %511 = vmatprep.subr.mxu0 0.0
        %512 = vmatpush1.msra.mxu0 0.0
        %513 = vmatprep.subr.mxu0 0.0
        %514 = vmatpush1.msra.mxu0 0.0
        %515 = vmatprep.subr.mxu0 0.0
        %516 = vmatpush1.msra.mxu0 0.0
        %517 = vmatprep.subr.mxu0 0.0
        %518 = vmatpush1.msra.mxu0 0.0
        %519 = vmatprep.subr.mxu0 0.0
        %520 = vmatpush1.msra.mxu0 0.0
        %521 = vmatprep.subr.mxu0 0.0
        %522 = vmatpush1.msra.mxu0 0.0
        %523 = vmatprep.subr.mxu0 0.0
        %524 = vmatpush1.msra.mxu0 0.0
        %525 = vmatprep.subr.mxu0 0.0
        %526 = vmatpush1.msra.mxu0 0.0
        %527 = vmatprep.subr.mxu0 0.0
        %528 = vmatpush1.msra.mxu0 0.0
        %529 = vmatprep.subr.mxu0 0.0
        %530 = vmatpush1.msra.mxu0 0.0
        %531 = vmatprep.subr.mxu0 0.0
        %532 = vmatpush1.msra.mxu0 0.0
        %533 = vmatprep.subr.mxu0 0.0
        %534 = vmatpush1.msra.mxu0 0.0
        %535 = vmatprep.subr.mxu0 0.0
        %536 = vmatpush1.msra.mxu0 0.0
        %537 = vmatprep.subr.mxu0 0.0
        %538 = vmatpush1.msra.mxu0 0.0
        %539 = vmatprep.subr.mxu0 0.0
        %540 = vmatpush1.msra.mxu0 0.0
        %541 = vmatprep.subr.mxu0 0.0
        %542 = vmatpush1.msra.mxu0 0.0
        %543 = vmatprep.subr.mxu0 0.0
        %544 = vmatpush1.msra.mxu0 0.0
        %545 = vmatprep.subr.mxu0 0.0
        %546 = vmatpush1.msra.mxu0 0.0
        %547 = vmatprep.subr.mxu0 0.0
        %548 = vmatpush1.msra.mxu0 0.0
        %549 = vmatprep.mubr.f32.mxu0 0.0
        %550 = vmatmul.mubr.f32.gmra.mrb[0].mxu0 %v234
        %v551 = vpop.f32.mrb[0].mxu0
        %v552 = vadd.f32 %v483, %v551
        %v553 = vpop.f32.mrb[0].mxu0
        %554 = vdwg.mxu0
        %556 = vrot.lane.b32.xlu0 %v552, 120
        %v557 = vpop.permute.xlu0 %556
        %v558 = vsel %vm309, %v552, 0
        %v560 = vsel %vm309, %v557, 0
        %562 = vmatprep.subr.mxu0 0.0
        %563 = vmatpush1.xpose.msra.mxu0 %v560
        %564 = vmatprep.subr.mxu0 0.0
        %565 = vmatpush1.xpose.msra.mxu0 0.0
        %566 = vmatprep.subr.mxu0 0.0
        %567 = vmatpush1.xpose.msra.mxu0 0.0
        %568 = vmatprep.subr.mxu0 0.0
        %569 = vmatpush1.xpose.msra.mxu0 0.0
        %570 = vmatprep.subr.mxu0 0.0
        %571 = vmatpush1.xpose.msra.mxu0 0.0
        %572 = vmatprep.subr.mxu0 0.0
        %573 = vmatpush1.xpose.msra.mxu0 0.0
        %574 = vmatprep.subr.mxu0 0.0
        %575 = vmatpush1.xpose.msra.mxu0 0.0
        %576 = vmatprep.subr.mxu0 0.0
        %577 = vmatpush1.xpose.msra.mxu0 0.0
        %578 = vmatprep.subr.mxu0 0.0
        %579 = vmatpush1.xpose.msra.mxu0 0.0
        %580 = vmatprep.subr.mxu0 0.0
        %581 = vmatpush1.xpose.msra.mxu0 0.0
        %582 = vmatprep.subr.mxu0 0.0
        %583 = vmatpush1.xpose.msra.mxu0 0.0
        %584 = vmatprep.subr.mxu0 0.0
        %585 = vmatpush1.xpose.msra.mxu0 0.0
        %586 = vmatprep.subr.mxu0 0.0
        %587 = vmatpush1.xpose.msra.mxu0 0.0
        %588 = vmatprep.subr.mxu0 0.0
        %589 = vmatpush1.xpose.msra.mxu0 0.0
        %590 = vmatprep.subr.mxu0 0.0
        %591 = vmatpush1.xpose.msra.mxu0 0.0
        %592 = vmatprep.subr.mxu0 0.0
        %593 = vmatpush1.xpose.msra.mxu0 0.0
        %594 = vmatprep.subr.mxu0 0.0
        %595 = vmatpush1.xpose.msra.mxu0 0.0
        %596 = vmatprep.subr.mxu0 0.0
        %597 = vmatpush1.xpose.msra.mxu0 0.0
        %598 = vmatprep.subr.mxu0 0.0
        %599 = vmatpush1.xpose.msra.mxu0 0.0
        %600 = vmatprep.subr.mxu0 0.0
        %601 = vmatpush1.xpose.msra.mxu0 0.0
        %602 = vmatprep.subr.mxu0 0.0
        %603 = vmatpush1.xpose.msra.mxu0 0.0
        %604 = vmatprep.subr.mxu0 0.0
        %605 = vmatpush1.xpose.msra.mxu0 0.0
        %606 = vmatprep.subr.mxu0 0.0
        %607 = vmatpush1.xpose.msra.mxu0 0.0
        %608 = vmatprep.subr.mxu0 0.0
        %609 = vmatpush1.xpose.msra.mxu0 0.0
        %610 = vmatprep.subr.mxu0 0.0
        %611 = vmatpush1.xpose.msra.mxu0 0.0
        %612 = vmatprep.subr.mxu0 0.0
        %613 = vmatpush1.xpose.msra.mxu0 0.0
        %614 = vmatprep.subr.mxu0 0.0
        %615 = vmatpush1.xpose.msra.mxu0 0.0
        %616 = vmatprep.subr.mxu0 0.0
        %617 = vmatpush1.xpose.msra.mxu0 0.0
        %618 = vmatprep.subr.mxu0 0.0
        %619 = vmatpush1.xpose.msra.mxu0 0.0
        %620 = vmatprep.subr.mxu0 0.0
        %621 = vmatpush1.xpose.msra.mxu0 0.0
        %622 = vmatprep.subr.mxu0 0.0
        %623 = vmatpush1.xpose.msra.mxu0 0.0
        %624 = vmatprep.subr.mxu0 0.0
        %625 = vmatpush1.xpose.msra.mxu0 0.0
        %626 = vmatprep.mubr.f32.mxu0 0.0
        %627 = vmatmul.mubr.f32.gmra.mrb[0].mxu0 %v558
        %v628 = vpop.f32.mrb[0].mxu0
        %v629 = vadd.f32 0.0, %v628
        %v630 = vpop.f32.mrb[0].mxu0
        %631 = vdwg.mxu0
        %v632 = vsel %vm309, %v629, -inf
        %633 = vmax.xlane.f32.xlu0 %v632
        %v634 = vpop.xlane.xlu0 %633
        %v635 = vsub.f32 %v629, %v634
        %v636 = vmul.f32 %v635, 1.442695
        %v637 = vpow.pop %v636
        %v638 = vsel %vm309, %v637, 0.0
        %639 = vadd.xlane.f32.xlu0 %v638
        %v640 = vpop.xlane.xlu0 %639
        %v641 = vrcp.pop %v640
        %v642 = vmul.f32 %v637, %v641
        %643 = vrot.lane.b32.xlu0 %v552, 112
        %v644 = vpop.permute.xlu0 %643
        %v647 = vsel %vm309, %v642, 0
        %649 = vmatprep.subr.mxu0 0.0
        %650 = vmatpush1.msra.mxu0 %v644
        %651 = vmatprep.subr.mxu0 0.0
        %652 = vmatpush1.msra.mxu0 0.0
        %653 = vmatprep.subr.mxu0 0.0
        %654 = vmatpush1.msra.mxu0 0.0
        %655 = vmatprep.subr.mxu0 0.0
        %656 = vmatpush1.msra.mxu0 0.0
        %657 = vmatprep.subr.mxu0 0.0
        %658 = vmatpush1.msra.mxu0 0.0
        %659 = vmatprep.subr.mxu0 0.0
        %660 = vmatpush1.msra.mxu0 0.0
        %661 = vmatprep.subr.mxu0 0.0
        %662 = vmatpush1.msra.mxu0 0.0
        %663 = vmatprep.subr.mxu0 0.0
        %664 = vmatpush1.msra.mxu0 0.0
        %665 = vmatprep.subr.mxu0 0.0
        %666 = vmatpush1.msra.mxu0 0.0
        %667 = vmatprep.subr.mxu0 0.0
        %668 = vmatpush1.msra.mxu0 0.0
        %669 = vmatprep.subr.mxu0 0.0
        %670 = vmatpush1.msra.mxu0 0.0
        %671 = vmatprep.subr.mxu0 0.0
        %672 = vmatpush1.msra.mxu0 0.0
        %673 = vmatprep.subr.mxu0 0.0
        %674 = vmatpush1.msra.mxu0 0.0
        %675 = vmatprep.subr.mxu0 0.0
        %676 = vmatpush1.msra.mxu0 0.0
        %677 = vmatprep.subr.mxu0 0.0
        %678 = vmatpush1.msra.mxu0 0.0
        %679 = vmatprep.subr.mxu0 0.0
        %680 = vmatpush1.msra.mxu0 0.0
        %681 = vmatprep.subr.mxu0 0.0
        %682 = vmatpush1.msra.mxu0 0.0
        %683 = vmatprep.subr.mxu0 0.0
        %684 = vmatpush1.msra.mxu0 0.0
        %685 = vmatprep.subr.mxu0 0.0
        %686 = vmatpush1.msra.mxu0 0.0
        %687 = vmatprep.subr.mxu0 0.0
        %688 = vmatpush1.msra.mxu0 0.0
        %689 = vmatprep.subr.mxu0 0.0
        %690 = vmatpush1.msra.mxu0 0.0
        %691 = vmatprep.subr.mxu0 0.0
        %692 = vmatpush1.msra.mxu0 0.0
        %693 = vmatprep.subr.mxu0 0.0
        %694 = vmatpush1.msra.mxu0 0.0
        %695 = vmatprep.subr.mxu0 0.0
        %696 = vmatpush1.msra.mxu0 0.0
        %697 = vmatprep.subr.mxu0 0.0
        %698 = vmatpush1.msra.mxu0 0.0
        %699 = vmatprep.subr.mxu0 0.0
        %700 = vmatpush1.msra.mxu0 0.0
        %701 = vmatprep.subr.mxu0 0.0
        %702 = vmatpush1.msra.mxu0 0.0
        %703 = vmatprep.subr.mxu0 0.0
        %704 = vmatpush1.msra.mxu0 0.0
        %705 = vmatprep.subr.mxu0 0.0
        %706 = vmatpush1.msra.mxu0 0.0
        %707 = vmatprep.subr.mxu0 0.0
        %708 = vmatpush1.msra.mxu0 0.0
        %709 = vmatprep.subr.mxu0 0.0
        %710 = vmatpush1.msra.mxu0 0.0
        %711 = vmatprep.subr.mxu0 0.0
        %712 = vmatpush1.msra.mxu0 0.0
        %713 = vmatprep.mubr.f32.mxu0 0.0
        %714 = vmatmul.mubr.f32.gmra.mrb[0].mxu0 %v647
        %v715 = vpop.f32.mrb[0].mxu0
        %v716 = vadd.f32 0.0, %v715
        %v717 = vpop.f32.mrb[0].mxu0
        %718 = vdwg.mxu0
        %720 = vrot.lane.b32.xlu0 %v716, 8
        %v721 = vpop.permute.xlu0 %720
        %vm723 = vcmask 130112
        %724 = vst.msk [vmem:[#allocation2] sm:$0xff] %vm723, %v721
        %s725 = scalar_lea.vmem %s1, 64
        %v726 = vld [vmem:[%s725] sm:$0xff]
        %v727 = vld [vmem:[%s725 + $0x8] sm:$0xff]
        %v728 = vld [vmem:[%s725 + $0x10] sm:$0xff]
        %v729 = vld [vmem:[%s725 + $0x18] sm:$0xff]
        %s730 = scalar_lea.vmem %s2, 2
        %v731 = vld [vmem:[%s730] sm:$0x1]
        %v733 = vlaneseq
        %v734 = vshrl.u32 %v733, 7
        %v735 = vsub.s32 0, %v734
        %v736 = vrot.slane %v731, %v735
        %738 = vmatprep.subr.mxu0 0.0
        %739 = vmatpush1.msra.mxu0 %v726
        %740 = vmatprep.subr.mxu0 0.0
        %741 = vmatpush1.msra.mxu0 %v727
        %742 = vmatprep.subr.mxu0 0.0
        %743 = vmatpush1.msra.mxu0 %v728
        %744 = vmatprep.subr.mxu0 0.0
        %745 = vmatpush1.msra.mxu0 %v729
        %746 = vmatprep.subr.mxu0 0.0
        %747 = vmatpush1.msra.mxu0 0.0
        %748 = vmatprep.subr.mxu0 0.0
        %749 = vmatpush1.msra.mxu0 0.0
        %750 = vmatprep.subr.mxu0 0.0
        %751 = vmatpush1.msra.mxu0 0.0
        %752 = vmatprep.subr.mxu0 0.0
        %753 = vmatpush1.msra.mxu0 0.0
        %754 = vmatprep.subr.mxu0 0.0
        %755 = vmatpush1.msra.mxu0 0.0
        %756 = vmatprep.subr.mxu0 0.0
        %757 = vmatpush1.msra.mxu0 0.0
        %758 = vmatprep.subr.mxu0 0.0
        %759 = vmatpush1.msra.mxu0 0.0
        %760 = vmatprep.subr.mxu0 0.0
        %761 = vmatpush1.msra.mxu0 0.0
        %762 = vmatprep.subr.mxu0 0.0
        %763 = vmatpush1.msra.mxu0 0.0
        %764 = vmatprep.subr.mxu0 0.0
        %765 = vmatpush1.msra.mxu0 0.0
        %766 = vmatprep.subr.mxu0 0.0
        %767 = vmatpush1.msra.mxu0 0.0
        %768 = vmatprep.subr.mxu0 0.0
        %769 = vmatpush1.msra.mxu0 0.0
        %770 = vmatprep.subr.mxu0 0.0
        %771 = vmatpush1.msra.mxu0 0.0
        %772 = vmatprep.subr.mxu0 0.0
        %773 = vmatpush1.msra.mxu0 0.0
        %774 = vmatprep.subr.mxu0 0.0
        %775 = vmatpush1.msra.mxu0 0.0
        %776 = vmatprep.subr.mxu0 0.0
        %777 = vmatpush1.msra.mxu0 0.0
        %778 = vmatprep.subr.mxu0 0.0
        %779 = vmatpush1.msra.mxu0 0.0
        %780 = vmatprep.subr.mxu0 0.0
        %781 = vmatpush1.msra.mxu0 0.0
        %782 = vmatprep.subr.mxu0 0.0
        %783 = vmatpush1.msra.mxu0 0.0
        %784 = vmatprep.subr.mxu0 0.0
        %785 = vmatpush1.msra.mxu0 0.0
        %786 = vmatprep.subr.mxu0 0.0
        %787 = vmatpush1.msra.mxu0 0.0
        %788 = vmatprep.subr.mxu0 0.0
        %789 = vmatpush1.msra.mxu0 0.0
        %790 = vmatprep.subr.mxu0 0.0
        %791 = vmatpush1.msra.mxu0 0.0
        %792 = vmatprep.subr.mxu0 0.0
        %793 = vmatpush1.msra.mxu0 0.0
        %794 = vmatprep.subr.mxu0 0.0
        %795 = vmatpush1.msra.mxu0 0.0
        %796 = vmatprep.subr.mxu0 0.0
        %797 = vmatpush1.msra.mxu0 0.0
        %798 = vmatprep.subr.mxu0 0.0
        %799 = vmatpush1.msra.mxu0 0.0
        %800 = vmatprep.subr.mxu0 0.0
        %801 = vmatpush1.msra.mxu0 0.0
        %802 = vmatprep.mubr.f32.mxu0 0.0
        %803 = vmatmul.mubr.f32.gmra.mrb[0].mxu0 %v234
        %v804 = vpop.f32.mrb[0].mxu0
        %v805 = vadd.f32 %v736, %v804
        %v806 = vpop.f32.mrb[0].mxu0
        %807 = vdwg.mxu0
        %809 = vrot.lane.b32.xlu0 %v805, 120
        %v810 = vpop.permute.xlu0 %809
        %v811 = vsel %vm309, %v805, 0
        %v813 = vsel %vm309, %v810, 0
        %815 = vmatprep.subr.mxu0 0.0
        %816 = vmatpush1.xpose.msra.mxu0 %v813
        %817 = vmatprep.subr.mxu0 0.0
        %818 = vmatpush1.xpose.msra.mxu0 0.0
        %819 = vmatprep.subr.mxu0 0.0
        %820 = vmatpush1.xpose.msra.mxu0 0.0
        %821 = vmatprep.subr.mxu0 0.0
        %822 = vmatpush1.xpose.msra.mxu0 0.0
        %823 = vmatprep.subr.mxu0 0.0
        %824 = vmatpush1.xpose.msra.mxu0 0.0
        %825 = vmatprep.subr.mxu0 0.0
        %826 = vmatpush1.xpose.msra.mxu0 0.0
        %827 = vmatprep.subr.mxu0 0.0
        %828 = vmatpush1.xpose.msra.mxu0 0.0
        %829 = vmatprep.subr.mxu0 0.0
        %830 = vmatpush1.xpose.msra.mxu0 0.0
        %831 = vmatprep.subr.mxu0 0.0
        %832 = vmatpush1.xpose.msra.mxu0 0.0
        %833 = vmatprep.subr.mxu0 0.0
        %834 = vmatpush1.xpose.msra.mxu0 0.0
        %835 = vmatprep.subr.mxu0 0.0
        %836 = vmatpush1.xpose.msra.mxu0 0.0
        %837 = vmatprep.subr.mxu0 0.0
        %838 = vmatpush1.xpose.msra.mxu0 0.0
        %839 = vmatprep.subr.mxu0 0.0
        %840 = vmatpush1.xpose.msra.mxu0 0.0
        %841 = vmatprep.subr.mxu0 0.0
        %842 = vmatpush1.xpose.msra.mxu0 0.0
        %843 = vmatprep.subr.mxu0 0.0
        %844 = vmatpush1.xpose.msra.mxu0 0.0
        %845 = vmatprep.subr.mxu0 0.0
        %846 = vmatpush1.xpose.msra.mxu0 0.0
        %847 = vmatprep.subr.mxu0 0.0
        %848 = vmatpush1.xpose.msra.mxu0 0.0
        %849 = vmatprep.subr.mxu0 0.0
        %850 = vmatpush1.xpose.msra.mxu0 0.0
        %851 = vmatprep.subr.mxu0 0.0
        %852 = vmatpush1.xpose.msra.mxu0 0.0
        %853 = vmatprep.subr.mxu0 0.0
        %854 = vmatpush1.xpose.msra.mxu0 0.0
        %855 = vmatprep.subr.mxu0 0.0
        %856 = vmatpush1.xpose.msra.mxu0 0.0
        %857 = vmatprep.subr.mxu0 0.0
        %858 = vmatpush1.xpose.msra.mxu0 0.0
        %859 = vmatprep.subr.mxu0 0.0
        %860 = vmatpush1.xpose.msra.mxu0 0.0
        %861 = vmatprep.subr.mxu0 0.0
        %862 = vmatpush1.xpose.msra.mxu0 0.0
        %863 = vmatprep.subr.mxu0 0.0
        %864 = vmatpush1.xpose.msra.mxu0 0.0
        %865 = vmatprep.subr.mxu0 0.0
        %866 = vmatpush1.xpose.msra.mxu0 0.0
        %867 = vmatprep.subr.mxu0 0.0
        %868 = vmatpush1.xpose.msra.mxu0 0.0
        %869 = vmatprep.subr.mxu0 0.0
        %870 = vmatpush1.xpose.msra.mxu0 0.0
        %871 = vmatprep.subr.mxu0 0.0
        %872 = vmatpush1.xpose.msra.mxu0 0.0
        %873 = vmatprep.subr.mxu0 0.0
        %874 = vmatpush1.xpose.msra.mxu0 0.0
        %875 = vmatprep.subr.mxu0 0.0
        %876 = vmatpush1.xpose.msra.mxu0 0.0
        %877 = vmatprep.subr.mxu0 0.0
        %878 = vmatpush1.xpose.msra.mxu0 0.0
        %879 = vmatprep.mubr.f32.mxu0 0.0
        %880 = vmatmul.mubr.f32.gmra.mrb[0].mxu0 %v811
        %v881 = vpop.f32.mrb[0].mxu0
        %v882 = vadd.f32 0.0, %v881
        %v883 = vpop.f32.mrb[0].mxu0
        %884 = vdwg.mxu0
        %v885 = vsel %vm309, %v882, -inf
        %886 = vmax.xlane.f32.xlu0 %v885
        %v887 = vpop.xlane.xlu0 %886
        %v888 = vsub.f32 %v882, %v887
        %v889 = vmul.f32 %v888, 1.442695
        %v890 = vpow.pop %v889
        %v891 = vsel %vm309, %v890, 0.0
        %892 = vadd.xlane.f32.xlu0 %v891
        %v893 = vpop.xlane.xlu0 %892
        %v894 = vrcp.pop %v893
        %v895 = vmul.f32 %v890, %v894
        %896 = vrot.lane.b32.xlu0 %v805, 112
        %v897 = vpop.permute.xlu0 %896
        %v900 = vsel %vm309, %v895, 0
        %902 = vmatprep.subr.mxu0 0.0
        %903 = vmatpush1.msra.mxu0 %v897
        %904 = vmatprep.subr.mxu0 0.0
        %905 = vmatpush1.msra.mxu0 0.0
        %906 = vmatprep.subr.mxu0 0.0
        %907 = vmatpush1.msra.mxu0 0.0
        %908 = vmatprep.subr.mxu0 0.0
        %909 = vmatpush1.msra.mxu0 0.0
        %910 = vmatprep.subr.mxu0 0.0
        %911 = vmatpush1.msra.mxu0 0.0
        %912 = vmatprep.subr.mxu0 0.0
        %913 = vmatpush1.msra.mxu0 0.0
        %914 = vmatprep.subr.mxu0 0.0
        %915 = vmatpush1.msra.mxu0 0.0
        %916 = vmatprep.subr.mxu0 0.0
        %917 = vmatpush1.msra.mxu0 0.0
        %918 = vmatprep.subr.mxu0 0.0
        %919 = vmatpush1.msra.mxu0 0.0
        %920 = vmatprep.subr.mxu0 0.0
        %921 = vmatpush1.msra.mxu0 0.0
        %922 = vmatprep.subr.mxu0 0.0
        %923 = vmatpush1.msra.mxu0 0.0
        %924 = vmatprep.subr.mxu0 0.0
        %925 = vmatpush1.msra.mxu0 0.0
        %926 = vmatprep.subr.mxu0 0.0
        %927 = vmatpush1.msra.mxu0 0.0
        %928 = vmatprep.subr.mxu0 0.0
        %929 = vmatpush1.msra.mxu0 0.0
        %930 = vmatprep.subr.mxu0 0.0
        %931 = vmatpush1.msra.mxu0 0.0
        %932 = vmatprep.subr.mxu0 0.0
        %933 = vmatpush1.msra.mxu0 0.0
        %934 = vmatprep.subr.mxu0 0.0
        %935 = vmatpush1.msra.mxu0 0.0
        %936 = vmatprep.subr.mxu0 0.0
        %937 = vmatpush1.msra.mxu0 0.0
        %938 = vmatprep.subr.mxu0 0.0
        %939 = vmatpush1.msra.mxu0 0.0
        %940 = vmatprep.subr.mxu0 0.0
        %941 = vmatpush1.msra.mxu0 0.0
        %942 = vmatprep.subr.mxu0 0.0
        %943 = vmatpush1.msra.mxu0 0.0
        %944 = vmatprep.subr.mxu0 0.0
        %945 = vmatpush1.msra.mxu0 0.0
        %946 = vmatprep.subr.mxu0 0.0
        %947 = vmatpush1.msra.mxu0 0.0
        %948 = vmatprep.subr.mxu0 0.0
        %949 = vmatpush1.msra.mxu0 0.0
        %950 = vmatprep.subr.mxu0 0.0
        %951 = vmatpush1.msra.mxu0 0.0
        %952 = vmatprep.subr.mxu0 0.0
        %953 = vmatpush1.msra.mxu0 0.0
        %954 = vmatprep.subr.mxu0 0.0
        %955 = vmatpush1.msra.mxu0 0.0
        %956 = vmatprep.subr.mxu0 0.0
        %957 = vmatpush1.msra.mxu0 0.0
        %958 = vmatprep.subr.mxu0 0.0
        %959 = vmatpush1.msra.mxu0 0.0
        %960 = vmatprep.subr.mxu0 0.0
        %961 = vmatpush1.msra.mxu0 0.0
        %962 = vmatprep.subr.mxu0 0.0
        %963 = vmatpush1.msra.mxu0 0.0
        %964 = vmatprep.subr.mxu0 0.0
        %965 = vmatpush1.msra.mxu0 0.0
        %966 = vmatprep.mubr.f32.mxu0 0.0
        %967 = vmatmul.mubr.f32.gmra.mrb[0].mxu0 %v900
        %v968 = vpop.f32.mrb[0].mxu0
        %v969 = vadd.f32 0.0, %v968
        %v970 = vpop.f32.mrb[0].mxu0
        %971 = vdwg.mxu0
        %973 = vrot.lane.b32.xlu0 %v969, 16
        %v974 = vpop.permute.xlu0 %973
        %vm976 = vcmask 195712
        %977 = vst.msk [vmem:[#allocation2] sm:$0xff] %vm976, %v974
        %s978 = scalar_lea.vmem %s1, 96
        %v979 = vld [vmem:[%s978] sm:$0xff]
        %v980 = vld [vmem:[%s978 + $0x8] sm:$0xff]
        %v981 = vld [vmem:[%s978 + $0x10] sm:$0xff]
        %v982 = vld [vmem:[%s978 + $0x18] sm:$0xff]
        %s983 = scalar_lea.vmem %s2, 3
        %v984 = vld [vmem:[%s983] sm:$0x1]
        %v986 = vlaneseq
        %v987 = vshrl.u32 %v986, 7
        %v988 = vsub.s32 0, %v987
        %v989 = vrot.slane %v984, %v988
        %991 = vmatprep.subr.mxu0 0.0
        %992 = vmatpush1.msra.mxu0 %v979
        %993 = vmatprep.subr.mxu0 0.0
        %994 = vmatpush1.msra.mxu0 %v980
        %995 = vmatprep.subr.mxu0 0.0
        %996 = vmatpush1.msra.mxu0 %v981
        %997 = vmatprep.subr.mxu0 0.0
        %998 = vmatpush1.msra.mxu0 %v982
        %999 = vmatprep.subr.mxu0 0.0
        %1000 = vmatpush1.msra.mxu0 0.0
        %1001 = vmatprep.subr.mxu0 0.0
        %1002 = vmatpush1.msra.mxu0 0.0
        %1003 = vmatprep.subr.mxu0 0.0
        %1004 = vmatpush1.msra.mxu0 0.0
        %1005 = vmatprep.subr.mxu0 0.0
        %1006 = vmatpush1.msra.mxu0 0.0
        %1007 = vmatprep.subr.mxu0 0.0
        %1008 = vmatpush1.msra.mxu0 0.0
        %1009 = vmatprep.subr.mxu0 0.0
        %1010 = vmatpush1.msra.mxu0 0.0
        %1011 = vmatprep.subr.mxu0 0.0
        %1012 = vmatpush1.msra.mxu0 0.0
        %1013 = vmatprep.subr.mxu0 0.0
        %1014 = vmatpush1.msra.mxu0 0.0
        %1015 = vmatprep.subr.mxu0 0.0
        %1016 = vmatpush1.msra.mxu0 0.0
        %1017 = vmatprep.subr.mxu0 0.0
        %1018 = vmatpush1.msra.mxu0 0.0
        %1019 = vmatprep.subr.mxu0 0.0
        %1020 = vmatpush1.msra.mxu0 0.0
        %1021 = vmatprep.subr.mxu0 0.0
        %1022 = vmatpush1.msra.mxu0 0.0
        %1023 = vmatprep.subr.mxu0 0.0
        %1024 = vmatpush1.msra.mxu0 0.0
        %1025 = vmatprep.subr.mxu0 0.0
        %1026 = vmatpush1.msra.mxu0 0.0
        %1027 = vmatprep.subr.mxu0 0.0
        %1028 = vmatpush1.msra.mxu0 0.0
        %1029 = vmatprep.subr.mxu0 0.0
        %1030 = vmatpush1.msra.mxu0 0.0
        %1031 = vmatprep.subr.mxu0 0.0
        %1032 = vmatpush1.msra.mxu0 0.0
        %1033 = vmatprep.subr.mxu0 0.0
        %1034 = vmatpush1.msra.mxu0 0.0
        %1035 = vmatprep.subr.mxu0 0.0
        %1036 = vmatpush1.msra.mxu0 0.0
        %1037 = vmatprep.subr.mxu0 0.0
        %1038 = vmatpush1.msra.mxu0 0.0
        %1039 = vmatprep.subr.mxu0 0.0
        %1040 = vmatpush1.msra.mxu0 0.0
        %1041 = vmatprep.subr.mxu0 0.0
        %1042 = vmatpush1.msra.mxu0 0.0
        %1043 = vmatprep.subr.mxu0 0.0
        %1044 = vmatpush1.msra.mxu0 0.0
        %1045 = vmatprep.subr.mxu0 0.0
        %1046 = vmatpush1.msra.mxu0 0.0
        %1047 = vmatprep.subr.mxu0 0.0
        %1048 = vmatpush1.msra.mxu0 0.0
        %1049 = vmatprep.subr.mxu0 0.0
        %1050 = vmatpush1.msra.mxu0 0.0
        %1051 = vmatprep.subr.mxu0 0.0
        %1052 = vmatpush1.msra.mxu0 0.0
        %1053 = vmatprep.subr.mxu0 0.0
        %1054 = vmatpush1.msra.mxu0 0.0
        %1055 = vmatprep.mubr.f32.mxu0 0.0
        %1056 = vmatmul.mubr.f32.gmra.mrb[0].mxu0 %v234
        %v1057 = vpop.f32.mrb[0].mxu0
        %v1058 = vadd.f32 %v989, %v1057
        %v1059 = vpop.f32.mrb[0].mxu0
        %1060 = vdwg.mxu0
        %1062 = vrot.lane.b32.xlu0 %v1058, 120
        %v1063 = vpop.permute.xlu0 %1062
        %v1064 = vsel %vm309, %v1058, 0
        %v1066 = vsel %vm309, %v1063, 0
        %1068 = vmatprep.subr.mxu0 0.0
        %1069 = vmatpush1.xpose.msra.mxu0 %v1066
        %1070 = vmatprep.subr.mxu0 0.0
        %1071 = vmatpush1.xpose.msra.mxu0 0.0
        %1072 = vmatprep.subr.mxu0 0.0
        %1073 = vmatpush1.xpose.msra.mxu0 0.0
        %1074 = vmatprep.subr.mxu0 0.0
        %1075 = vmatpush1.xpose.msra.mxu0 0.0
        %1076 = vmatprep.subr.mxu0 0.0
        %1077 = vmatpush1.xpose.msra.mxu0 0.0
        %1078 = vmatprep.subr.mxu0 0.0
        %1079 = vmatpush1.xpose.msra.mxu0 0.0
        %1080 = vmatprep.subr.mxu0 0.0
        %1081 = vmatpush1.xpose.msra.mxu0 0.0
        %1082 = vmatprep.subr.mxu0 0.0
        %1083 = vmatpush1.xpose.msra.mxu0 0.0
        %1084 = vmatprep.subr.mxu0 0.0
        %1085 = vmatpush1.xpose.msra.mxu0 0.0
        %1086 = vmatprep.subr.mxu0 0.0
        %1087 = vmatpush1.xpose.msra.mxu0 0.0
        %1088 = vmatprep.subr.mxu0 0.0
        %1089 = vmatpush1.xpose.msra.mxu0 0.0
        %1090 = vmatprep.subr.mxu0 0.0
        %1091 = vmatpush1.xpose.msra.mxu0 0.0
        %1092 = vmatprep.subr.mxu0 0.0
        %1093 = vmatpush1.xpose.msra.mxu0 0.0
        %1094 = vmatprep.subr.mxu0 0.0
        %1095 = vmatpush1.xpose.msra.mxu0 0.0
        %1096 = vmatprep.subr.mxu0 0.0
        %1097 = vmatpush1.xpose.msra.mxu0 0.0
        %1098 = vmatprep.subr.mxu0 0.0
        %1099 = vmatpush1.xpose.msra.mxu0 0.0
        %1100 = vmatprep.subr.mxu0 0.0
        %1101 = vmatpush1.xpose.msra.mxu0 0.0
        %1102 = vmatprep.subr.mxu0 0.0
        %1103 = vmatpush1.xpose.msra.mxu0 0.0
        %1104 = vmatprep.subr.mxu0 0.0
        %1105 = vmatpush1.xpose.msra.mxu0 0.0
        %1106 = vmatprep.subr.mxu0 0.0
        %1107 = vmatpush1.xpose.msra.mxu0 0.0
        %1108 = vmatprep.subr.mxu0 0.0
        %1109 = vmatpush1.xpose.msra.mxu0 0.0
        %1110 = vmatprep.subr.mxu0 0.0
        %1111 = vmatpush1.xpose.msra.mxu0 0.0
        %1112 = vmatprep.subr.mxu0 0.0
        %1113 = vmatpush1.xpose.msra.mxu0 0.0
        %1114 = vmatprep.subr.mxu0 0.0
        %1115 = vmatpush1.xpose.msra.mxu0 0.0
        %1116 = vmatprep.subr.mxu0 0.0
        %1117 = vmatpush1.xpose.msra.mxu0 0.0
        %1118 = vmatprep.subr.mxu0 0.0
        %1119 = vmatpush1.xpose.msra.mxu0 0.0
        %1120 = vmatprep.subr.mxu0 0.0
        %1121 = vmatpush1.xpose.msra.mxu0 0.0
        %1122 = vmatprep.subr.mxu0 0.0
        %1123 = vmatpush1.xpose.msra.mxu0 0.0
        %1124 = vmatprep.subr.mxu0 0.0
        %1125 = vmatpush1.xpose.msra.mxu0 0.0
        %1126 = vmatprep.subr.mxu0 0.0
        %1127 = vmatpush1.xpose.msra.mxu0 0.0
        %1128 = vmatprep.subr.mxu0 0.0
        %1129 = vmatpush1.xpose.msra.mxu0 0.0
        %1130 = vmatprep.subr.mxu0 0.0
        %1131 = vmatpush1.xpose.msra.mxu0 0.0
        %1132 = vmatprep.mubr.f32.mxu0 0.0
        %1133 = vmatmul.mubr.f32.gmra.mrb[0].mxu0 %v1064
        %v1134 = vpop.f32.mrb[0].mxu0
        %v1135 = vadd.f32 0.0, %v1134
        %v1136 = vpop.f32.mrb[0].mxu0
        %1137 = vdwg.mxu0
        %v1138 = vsel %vm309, %v1135, -inf
        %1139 = vmax.xlane.f32.xlu0 %v1138
        %v1140 = vpop.xlane.xlu0 %1139
        %v1141 = vsub.f32 %v1135, %v1140
        %v1142 = vmul.f32 %v1141, 1.442695
        %v1143 = vpow.pop %v1142
        %v1144 = vsel %vm309, %v1143, 0.0
        %1145 = vadd.xlane.f32.xlu0 %v1144
        %v1146 = vpop.xlane.xlu0 %1145
        %v1147 = vrcp.pop %v1146
        %v1148 = vmul.f32 %v1143, %v1147
        %1149 = vrot.lane.b32.xlu0 %v1058, 112
        %v1150 = vpop.permute.xlu0 %1149
        %v1153 = vsel %vm309, %v1148, 0
        %1155 = vmatprep.subr.mxu0 0.0
        %1156 = vmatpush1.msra.mxu0 %v1150
        %1157 = vmatprep.subr.mxu0 0.0
        %1158 = vmatpush1.msra.mxu0 0.0
        %1159 = vmatprep.subr.mxu0 0.0
        %1160 = vmatpush1.msra.mxu0 0.0
        %1161 = vmatprep.subr.mxu0 0.0
        %1162 = vmatpush1.msra.mxu0 0.0
        %1163 = vmatprep.subr.mxu0 0.0
        %1164 = vmatpush1.msra.mxu0 0.0
        %1165 = vmatprep.subr.mxu0 0.0
        %1166 = vmatpush1.msra.mxu0 0.0
        %1167 = vmatprep.subr.mxu0 0.0
        %1168 = vmatpush1.msra.mxu0 0.0
        %1169 = vmatprep.subr.mxu0 0.0
        %1170 = vmatpush1.msra.mxu0 0.0
        %1171 = vmatprep.subr.mxu0 0.0
        %1172 = vmatpush1.msra.mxu0 0.0
        %1173 = vmatprep.subr.mxu0 0.0
        %1174 = vmatpush1.msra.mxu0 0.0
        %1175 = vmatprep.subr.mxu0 0.0
        %1176 = vmatpush1.msra.mxu0 0.0
        %1177 = vmatprep.subr.mxu0 0.0
        %1178 = vmatpush1.msra.mxu0 0.0
        %1179 = vmatprep.subr.mxu0 0.0
        %1180 = vmatpush1.msra.mxu0 0.0
        %1181 = vmatprep.subr.mxu0 0.0
        %1182 = vmatpush1.msra.mxu0 0.0
        %1183 = vmatprep.subr.mxu0 0.0
        %1184 = vmatpush1.msra.mxu0 0.0
        %1185 = vmatprep.subr.mxu0 0.0
        %1186 = vmatpush1.msra.mxu0 0.0
        %1187 = vmatprep.subr.mxu0 0.0
        %1188 = vmatpush1.msra.mxu0 0.0
        %1189 = vmatprep.subr.mxu0 0.0
        %1190 = vmatpush1.msra.mxu0 0.0
        %1191 = vmatprep.subr.mxu0 0.0
        %1192 = vmatpush1.msra.mxu0 0.0
        %1193 = vmatprep.subr.mxu0 0.0
        %1194 = vmatpush1.msra.mxu0 0.0
        %1195 = vmatprep.subr.mxu0 0.0
        %1196 = vmatpush1.msra.mxu0 0.0
        %1197 = vmatprep.subr.mxu0 0.0
        %1198 = vmatpush1.msra.mxu0 0.0
        %1199 = vmatprep.subr.mxu0 0.0
        %1200 = vmatpush1.msra.mxu0 0.0
        %1201 = vmatprep.subr.mxu0 0.0
        %1202 = vmatpush1.msra.mxu0 0.0
        %1203 = vmatprep.subr.mxu0 0.0
        %1204 = vmatpush1.msra.mxu0 0.0
        %1205 = vmatprep.subr.mxu0 0.0
        %1206 = vmatpush1.msra.mxu0 0.0
        %1207 = vmatprep.subr.mxu0 0.0
        %1208 = vmatpush1.msra.mxu0 0.0
        %1209 = vmatprep.subr.mxu0 0.0
        %1210 = vmatpush1.msra.mxu0 0.0
        %1211 = vmatprep.subr.mxu0 0.0
        %1212 = vmatpush1.msra.mxu0 0.0
        %1213 = vmatprep.subr.mxu0 0.0
        %1214 = vmatpush1.msra.mxu0 0.0
        %1215 = vmatprep.subr.mxu0 0.0
        %1216 = vmatpush1.msra.mxu0 0.0
        %1217 = vmatprep.subr.mxu0 0.0
        %1218 = vmatpush1.msra.mxu0 0.0
        %1219 = vmatprep.mubr.f32.mxu0 0.0
        %1220 = vmatmul.mubr.f32.gmra.mrb[0].mxu0 %v1153
        %v1221 = vpop.f32.mrb[0].mxu0
        %v1222 = vadd.f32 0.0, %v1221
        %v1223 = vpop.f32.mrb[0].mxu0
        %1224 = vdwg.mxu0
        %1226 = vrot.lane.b32.xlu0 %v1222, 24
        %v1227 = vpop.permute.xlu0 %1226
        %vm1229 = vcmask 261312
        %1230 = vst.msk [vmem:[#allocation2] sm:$0xff] %vm1229, %v1227
        %v1231 = vld [vmem:[#allocation2] sm:$0xff]
        %v1232 = vld [vmem:[%s3] sm:$0xff]
        %v1233 = vld [vmem:[%s3 + $0x8] sm:$0xff]
        %v1234 = vld [vmem:[%s3 + $0x10] sm:$0xff]
        %v1235 = vld [vmem:[%s3 + $0x18] sm:$0xff]
        %v1236 = vld [vmem:[%s4] sm:$0x1]
        %v1238 = vlaneseq
        %v1239 = vshrl.u32 %v1238, 7
        %v1240 = vsub.s32 0, %v1239
        %v1241 = vrot.slane %v1236, %v1240
        %v1244 = vsel %vm232, %v1231, 0
        %1246 = vmatprep.subr.mxu0 0.0
        %1247 = vmatpush1.msra.mxu0 %v1232
        %1248 = vmatprep.subr.mxu0 0.0
        %1249 = vmatpush1.msra.mxu0 %v1233
        %1250 = vmatprep.subr.mxu0 0.0
        %1251 = vmatpush1.msra.mxu0 %v1234
        %1252 = vmatprep.subr.mxu0 0.0
        %1253 = vmatpush1.msra.mxu0 %v1235
        %1254 = vmatprep.subr.mxu0 0.0
        %1255 = vmatpush1.msra.mxu0 0.0
        %1256 = vmatprep.subr.mxu0 0.0
        %1257 = vmatpush1.msra.mxu0 0.0
        %1258 = vmatprep.subr.mxu0 0.0
        %1259 = vmatpush1.msra.mxu0 0.0
        %1260 = vmatprep.subr.mxu0 0.0
        %1261 = vmatpush1.msra.mxu0 0.0
        %1262 = vmatprep.subr.mxu0 0.0
        %1263 = vmatpush1.msra.mxu0 0.0
        %1264 = vmatprep.subr.mxu0 0.0
        %1265 = vmatpush1.msra.mxu0 0.0
        %1266 = vmatprep.subr.mxu0 0.0
        %1267 = vmatpush1.msra.mxu0 0.0
        %1268 = vmatprep.subr.mxu0 0.0
        %1269 = vmatpush1.msra.mxu0 0.0
        %1270 = vmatprep.subr.mxu0 0.0
        %1271 = vmatpush1.msra.mxu0 0.0
        %1272 = vmatprep.subr.mxu0 0.0
        %1273 = vmatpush1.msra.mxu0 0.0
        %1274 = vmatprep.subr.mxu0 0.0
        %1275 = vmatpush1.msra.mxu0 0.0
        %1276 = vmatprep.subr.mxu0 0.0
        %1277 = vmatpush1.msra.mxu0 0.0
        %1278 = vmatprep.subr.mxu0 0.0
        %1279 = vmatpush1.msra.mxu0 0.0
        %1280 = vmatprep.subr.mxu0 0.0
        %1281 = vmatpush1.msra.mxu0 0.0
        %1282 = vmatprep.subr.mxu0 0.0
        %1283 = vmatpush1.msra.mxu0 0.0
        %1284 = vmatprep.subr.mxu0 0.0
        %1285 = vmatpush1.msra.mxu0 0.0
        %1286 = vmatprep.subr.mxu0 0.0
        %1287 = vmatpush1.msra.mxu0 0.0
        %1288 = vmatprep.subr.mxu0 0.0
        %1289 = vmatpush1.msra.mxu0 0.0
        %1290 = vmatprep.subr.mxu0 0.0
        %1291 = vmatpush1.msra.mxu0 0.0
        %1292 = vmatprep.subr.mxu0 0.0
        %1293 = vmatpush1.msra.mxu0 0.0
        %1294 = vmatprep.subr.mxu0 0.0
        %1295 = vmatpush1.msra.mxu0 0.0
        %1296 = vmatprep.subr.mxu0 0.0
        %1297 = vmatpush1.msra.mxu0 0.0
        %1298 = vmatprep.subr.mxu0 0.0
        %1299 = vmatpush1.msra.mxu0 0.0
        %1300 = vmatprep.subr.mxu0 0.0
        %1301 = vmatpush1.msra.mxu0 0.0
        %1302 = vmatprep.subr.mxu0 0.0
        %1303 = vmatpush1.msra.mxu0 0.0
        %1304 = vmatprep.subr.mxu0 0.0
        %1305 = vmatpush1.msra.mxu0 0.0
        %1306 = vmatprep.subr.mxu0 0.0
        %1307 = vmatpush1.msra.mxu0 0.0
        %1308 = vmatprep.subr.mxu0 0.0
        %1309 = vmatpush1.msra.mxu0 0.0
        %1310 = vmatprep.mubr.f32.mxu0 0.0
        %1311 = vmatmul.mubr.f32.gmra.mrb[0].mxu0 %v1244
        %v1312 = vpop.f32.mrb[0].mxu0
        %v1313 = vadd.f32 %v1241, %v1312
        %v1314 = vpop.f32.mrb[0].mxu0
        %1315 = vdwg.mxu0
        %1316 = vst.msk [vmem:[%s215] sm:$0xff] %vm232, %v1313
        %s1317 = sand.u32 %s137, 1
        %s1318 = scalar_lea.sflag [#allocation4], %s1317
        %s1319 = sand.u32 %s137, 1
        %s1320 = smul.addr %s1319, 8
        %s1321 = scalar_lea.vmem [#allocation3], %s1320
        // Predicated region
        $region41: #{tpu_custom_call.1} parent=39 // pred_check
          %p1322 = pneg %p147
        $region42: #{tpu_custom_call.1} parent=39 // pred_check_branch
          %1324 = sbr.rel (%p1322) target = $region44
        $region43: #{tpu_custom_call.1} parent=39 // pred_region
          %s1326 = ssub.s32 128, 128
          %1327 = vsyncadd %s1318, %s1326
          %s1328 = smul.addr %s19, 128
          %s1329 = scalar_lea.hbm %s5, %s1328
          %s1331 = sshll.u32 %s1321, 4
          %s1332 = int_to_ptr.vmem [resolvable:$true] %s1331
          %1334 = dma.vmem_to_hbm [thread:$0]  %s1332, 128, %s1329, %s1318
        $region44: #{tpu_custom_call.1} parent=39 // pred_fallthru
          _
      $region40: #{tpu_custom_call.1} parent=5 // pred_fallthru
        _
      %p1335 = scmp.le.s32.totalorder 2, %s14
      // Predicated region
      $region45: #{tpu_custom_call.1} parent=5 // pred_check
        %p1336 = pneg %p1335
      $region46: #{tpu_custom_call.1} parent=5 // pred_check_branch
        %1338 = sbr.rel (%p1336) target = $region48
      $region47: #{tpu_custom_call.1} parent=5 // pred_region
        %s1339 = ssub.s32 %s14, 2
        // Predicated region
        $region49: #{tpu_custom_call.1} parent=47 // pred_check
          %p1340 = pneg %p153
        $region50: #{tpu_custom_call.1} parent=47 // pred_check_branch
          %1342 = sbr.rel (%p1340) target = $region52
        $region51: #{tpu_custom_call.1} parent=47 // pred_region
          %s1343 = sand.u32 %s138, 1
          %s1344 = scalar_lea.sflag [#allocation4], %s1343
          %s1345 = sand.u32 %s138, 1
          %s1346 = smul.addr %s1345, 8
          %s1347 = scalar_lea.vmem [#allocation3], %s1346
          %1348 = dma.done %s1344, 128
        $region52: #{tpu_custom_call.1} parent=47 // pred_fallthru
          _
      $region48: #{tpu_custom_call.1} parent=5 // pred_fallthru
        _
    $region6: #{tpu_custom_call.1} parent=1 // loop_footer
      %s18 = sadd.s32 1, %s14
    $region7: #{tpu_custom_call.1} parent=1 // loop_footer_branch
      %13 = sbr.rel target = $region3
    $region8: #{tpu_custom_call.1} parent=1 // loop_exit
      _
    %1349 = vsyncpa [#allocation4], 1
    %s1350 = scalar_lea.sflag [#allocation4], 1
    %1351 = vsyncpa %s1350, 1

</llo_original>
